<compile_context>
chip_gen: v5e
topology: v5e:2x2
jax: 0.10.0
libtpu: 0.0.40
codegen_flags: <defaults>
</compile_context>

<pallas_src>
import jax
import jax.numpy as jnp
from jax.experimental import pallas as pl
from jax.experimental.pallas import tpu as pltpu


# ----------------------------------------------------------------------------
# Fused multi-layer LSTM wavefront kernel: one pallas_call, grid=(1,),
# everything VMEM/register resident.
# ----------------------------------------------------------------------------
def _make_wavefront_lstm_kernel(n_layers, S, B, H):
    def kernel(*refs):
        emb_ref = refs[0]                        # (S*B, E) time-major layer-0 input
        # layer 0: (W_ih^T, W_hh^T, bias); layers >= 1: ([W_ih^T;W_hh^T], bias)
        idx = 1
        layer_refs = []
        for l in range(n_layers):
            n = 3 if l == 0 else 2
            layer_refs.append(tuple(refs[idx:idx + n]))
            idx += n
        out_ref = refs[idx]                      # (B, S*H) batch-first flattened output
        h_out_ref = refs[idx + 1]                # (n_layers, B, H) final hidden
        c_out_ref = refs[idx + 2]                # (n_layers, B, H) final cell

        # Load the (tiny) weights once.
        w_ih0 = layer_refs[0][0][...]            # (E, 4H), gate order [i, f, o, g]
        w_hh0 = layer_refs[0][1][...]            # (H, 4H)
        bias0 = layer_refs[0][2][...]            # (1, 4H) = b_ih + b_hh
        w_cat = [None] + [layer_refs[l][0][...] for l in range(1, n_layers)]   # (2H, 4H)
        bias = [bias0] + [layer_refs[l][1][...] for l in range(1, n_layers)]   # (1, 4H)

        # Hoisted layer-0 input projection: ONE MXU matmul covers all S steps
        # (bias folded in here, so the recurrence only adds the h @ W_hh term).
        gates_x0 = jnp.dot(emb_ref[...], w_ih0,
                           preferred_element_type=jnp.float32) + bias0        # (S*B, 4H)

        h = [jnp.zeros((B, H), jnp.float32) for _ in range(n_layers)]
        c = [jnp.zeros((B, H), jnp.float32) for _ in range(n_layers)]
        out_chunks = []                          # last layer's h_t, in time order

        # Wavefront: step w runs layer l on timestep w-l. All reads below use
        # the states as of the END of step w-1 (no in-step read-after-write),
        # so updating h[l]/c[l] afterwards is safe for any n_layers.
        for w in range(S + n_layers - 1):
            active = [l for l in range(n_layers) if 0 <= w - l < S]

            pres = []
            for l in active:
                if l == 0:
                    t = w
                    pre = gates_x0[t * B:(t + 1) * B, :] + jnp.dot(
                        h[0], w_hh0, preferred_element_type=jnp.float32)
                else:
                    # Layer l's input at timestep w-l is layer l-1's output
                    # from wavefront step w-1 (== current register value).
                    xin = jnp.concatenate([h[l - 1], h[l]], axis=1)            # (B, 2H)
                    pre = jnp.dot(xin, w_cat[l],
                                  preferred_element_type=jnp.float32) + bias[l]
                pres.append(pre)

            if len(active) > 1:
                gates = jnp.concatenate(pres, axis=0)                          # (nact*B, 4H)
                c_stack = jnp.concatenate([c[l] for l in active], axis=0)      # (nact*B, H)
            else:
                gates = pres[0]
                c_stack = c[active[0]]

            # Gate order [i, f, o, g]: one sigmoid over the 3H [i,f,o] block,
            # one tanh over the g block — stacked across all active layers.
            sg = jax.nn.sigmoid(gates[:, 0:3 * H])
            i_g = sg[:, 0 * H:1 * H]
            f_g = sg[:, 1 * H:2 * H]
            o_g = sg[:, 2 * H:3 * H]
            g_g = jnp.tanh(gates[:, 3 * H:4 * H])

            c_new = f_g * c_stack + i_g * g_g
            h_new = o_g * jnp.tanh(c_new)

            for a, l in enumerate(active):
                h[l] = h_new[a * B:(a + 1) * B, :]
                c[l] = c_new[a * B:(a + 1) * B, :]
                if l == n_layers - 1:
                    out_chunks.append(h[l])

            # NOTE: pltpu.matmul_push_rhs staging of W_hh across steps is a
            # follow-up micro-opt; skipped here for robustness.

        # Single lane-dense, batch-first store: row b = [h_0[b], ..., h_{S-1}[b]].
        out_ref[...] = jnp.concatenate(out_chunks, axis=-1)                    # (B, S*H)

        # Final states written exactly once per layer.
        for l in range(n_layers):
            h_out_ref[l] = h[l]
            c_out_ref[l] = c[l]

    return kernel


def fused_lstm_pallas(emb2, layers, *, S, B):
    """Run the whole LSTM stack in one pallas_call.

    emb2:   (S*B, E) float32 time-major-flattened embeddings (row = t*B + b).
    layers: layer 0 -> {'w_ih_t': (E,4H), 'w_hh_t': (H,4H), 'bias': (1,4H)};
            layer l>=1 -> {'w_cat_t': (2H,4H), 'bias': (1,4H)}.
            Gate columns are in [i, f, o, g] order; biases are b_ih + b_hh.
    Returns (out_bf (B, S*H), hidden (n_layers, B, H), cell (n_layers, B, H)).
    """
    n_layers = len(layers)
    H = layers[0]["w_hh_t"].shape[0]

    operands = [emb2]
    in_specs = [pl.BlockSpec(emb2.shape, lambda i: (0, 0))]
    for l, layer in enumerate(layers):
        names = ("w_ih_t", "w_hh_t", "bias") if l == 0 else ("w_cat_t", "bias")
        for name in names:
            w = layer[name]
            operands.append(w)
            in_specs.append(pl.BlockSpec(w.shape, lambda i: (0, 0)))

    out_shape = (
        jax.ShapeDtypeStruct((B, S * H), jnp.float32),
        jax.ShapeDtypeStruct((n_layers, B, H), jnp.float32),
        jax.ShapeDtypeStruct((n_layers, B, H), jnp.float32),
    )
    out_specs = (
        pl.BlockSpec((B, S * H), lambda i: (0, 0)),
        pl.BlockSpec((n_layers, B, H), lambda i: (0, 0, 0)),
        pl.BlockSpec((n_layers, B, H), lambda i: (0, 0, 0)),
    )

    grid_spec = pltpu.PrefetchScalarGridSpec(
        num_scalar_prefetch=0,
        grid=(1,),                 # whole problem VMEM-resident at these sizes
        in_specs=in_specs,
        out_specs=out_specs,
        scratch_shapes=(),         # inter-layer activations live in registers
    )

    kernel = _make_wavefront_lstm_kernel(n_layers, S, B, H)
    return pl.pallas_call(
        kernel,
        out_shape=out_shape,
        grid_spec=grid_spec,
        compiler_params=pltpu.CompilerParams(
            dimension_semantics=("arbitrary",)),
    )(*operands)


# ----------------------------------------------------------------------------
# Encoder forward (embedding gather + layout glue in plain JAX).
# ----------------------------------------------------------------------------
def encoder_forward(src, params):
    """src: (B, S) int32 token ids.
    Returns (outputs (B,S,H), hidden (n_layers,B,H), cell (n_layers,B,H))."""
    B, S = src.shape
    layers = params["lstm"]
    H = layers[0]["w_hh_t"].shape[0]

    # Gather the embedding directly in time-major order (only the tiny (B, S)
    # index array is transposed).  nn.Dropout (eval mode) == identity.
    emb_tm = jnp.take(params["embedding"], src.T, axis=0)          # (S, B, E)
    emb2 = emb_tm.reshape(S * B, emb_tm.shape[-1]).astype(jnp.float32)

    out_bf, hidden, cell = fused_lstm_pallas(emb2, layers, S=S, B=B)

    # Kernel already emits batch-first, lane-dense (B, S*H): reshape is free.
    outputs = out_bf.reshape(B, S, H)
    return outputs, hidden, cell


# ----------------------------------------------------------------------------
# Deterministic parameter init (PyTorch defaults), pre-packed in kernel layout:
#  - weights transposed to (in_dim, 4H)
#  - gate blocks reordered [i, f, g, o] -> [i, f, o, g]
#  - b_ih + b_hh folded into one bias row
#  - for layers >= 1, W_ih^T and W_hh^T stacked into one (2H, 4H) matrix so the
#    per-step input+recurrent projection is a single MXU matmul.
# ----------------------------------------------------------------------------
def _reorder_ifgo_to_ifog(m, H):
    # PyTorch row blocks: [i (0:H), f (H:2H), g (2H:3H), o (3H:4H)] -> [i, f, o, g]
    return jnp.concatenate([m[0:H], m[H:2 * H], m[3 * H:4 * H], m[2 * H:3 * H]],
                           axis=0)


def init_params(key, input_dim, emb_dim, hid_dim, n_layers):
    keys = jax.random.split(key, 1 + 4 * n_layers)
    params = {"embedding": jax.random.normal(keys[0], (input_dim, emb_dim),
                                             dtype=jnp.float32)}
    bound = 1.0 / float(hid_dim) ** 0.5
    layers = []
    for l in range(n_layers):
        in_dim = emb_dim if l == 0 else hid_dim
        k_wih, k_whh, k_bih, k_bhh = keys[1 + 4 * l: 1 + 4 * (l + 1)]
        w_ih = jax.random.uniform(k_wih, (4 * hid_dim, in_dim),
                                  minval=-bound, maxval=bound, dtype=jnp.float32)
        w_hh = jax.random.uniform(k_whh, (4 * hid_dim, hid_dim),
                                  minval=-bound, maxval=bound, dtype=jnp.float32)
        b_ih = jax.random.uniform(k_bih, (4 * hid_dim,),
                                  minval=-bound, maxval=bound, dtype=jnp.float32)
        b_hh = jax.random.uniform(k_bhh, (4 * hid_dim,),
                                  minval=-bound, maxval=bound, dtype=jnp.float32)
        w_ih_t = _reorder_ifgo_to_ifog(w_ih, hid_dim).T                        # (in, 4H)
        w_hh_t = _reorder_ifgo_to_ifog(w_hh, hid_dim).T                        # (H, 4H)
        bias = _reorder_ifgo_to_ifog(b_ih + b_hh,
                                     hid_dim).reshape(1, 4 * hid_dim)          # (1, 4H)
        if l == 0:
            layers.append({"w_ih_t": w_ih_t, "w_hh_t": w_hh_t, "bias": bias})
        else:
            layers.append({
                "w_hh_t": w_hh_t,                                              # kept for H lookup
                "w_cat_t": jnp.concatenate([w_ih_t, w_hh_t], axis=0),          # (2H, 4H)
                "bias": bias,
            })
    params["lstm"] = layers
    return params


if __name__ == "__main__":
    INPUT_DIM = 50    # vocab size
    EMB_DIM = 32
    HID_DIM = 32
    N_LAYERS = 2
    BATCH = 2
    SEQ = 8

    key = jax.random.PRNGKey(0)
    k_params, k_src = jax.random.split(key)
    params = init_params(k_params, INPUT_DIM, EMB_DIM, HID_DIM, N_LAYERS)
    src = jax.random.randint(k_src, (BATCH, SEQ), 0, INPUT_DIM, dtype=jnp.int32)

    outputs, hidden, cell = jax.jit(encoder_forward)(src, params)
    jax.block_until_ready((outputs, hidden, cell))

    assert outputs.shape == (BATCH, SEQ, HID_DIM)
    assert hidden.shape == (N_LAYERS, BATCH, HID_DIM)
    assert cell.shape == (N_LAYERS, BATCH, HID_DIM)
    assert bool(jnp.all(jnp.isfinite(outputs)))
    assert bool(jnp.all(jnp.isfinite(hidden)))
    assert bool(jnp.all(jnp.isfinite(cell)))
    print("KERNEL_OK")
</pallas_src>

<mosaic_0001>
module attributes {stable_mosaic.version = 11 : i64} {
  func.func @kernel(%arg0: i32, %arg1: memref<16x32xf32, #tpu.memory_space<vmem>>, %arg2: memref<32x128xf32, #tpu.memory_space<vmem>>, %arg3: memref<32x128xf32, #tpu.memory_space<vmem>>, %arg4: memref<1x128xf32, #tpu.memory_space<vmem>>, %arg5: memref<64x128xf32, #tpu.memory_space<vmem>>, %arg6: memref<1x128xf32, #tpu.memory_space<vmem>>, %arg7: memref<2x256xf32, #tpu.memory_space<vmem>>, %arg8: memref<2x2x32xf32, #tpu.memory_space<vmem>>, %arg9: memref<2x2x32xf32, #tpu.memory_space<vmem>>) attributes {dimension_semantics = [#tpu.dimension_semantics<arbitrary>], iteration_bounds = array<i64: 1>, scalar_prefetch = 0 : i64, scratch_operands = 0 : i64, tpu.core_type = #tpu.core_type<tc>, window_params = [{pipeline_mode = #tpu.pipeline_mode<synchronous>, transform_indices = @transform_0, window_bounds = array<i64: 16, 32>}, {pipeline_mode = #tpu.pipeline_mode<synchronous>, transform_indices = @transform_1, window_bounds = array<i64: 32, 128>}, {pipeline_mode = #tpu.pipeline_mode<synchronous>, transform_indices = @transform_2, window_bounds = array<i64: 32, 128>}, {pipeline_mode = #tpu.pipeline_mode<synchronous>, transform_indices = @transform_3, window_bounds = array<i64: 1, 128>}, {pipeline_mode = #tpu.pipeline_mode<synchronous>, transform_indices = @transform_4, window_bounds = array<i64: 64, 128>}, {pipeline_mode = #tpu.pipeline_mode<synchronous>, transform_indices = @transform_5, window_bounds = array<i64: 1, 128>}, {pipeline_mode = #tpu.pipeline_mode<synchronous>, transform_indices = @transform_6, window_bounds = array<i64: 2, 256>}, {pipeline_mode = #tpu.pipeline_mode<synchronous>, transform_indices = @transform_7, window_bounds = array<i64: 2, 2, 32>}, {pipeline_mode = #tpu.pipeline_mode<synchronous>, transform_indices = @transform_8, window_bounds = array<i64: 2, 2, 32>}]} {
    %c0 = arith.constant 0 : index
    %c0_0 = arith.constant 0 : index
    %0 = vector.load %arg2[%c0, %c0_0] : memref<32x128xf32, #tpu.memory_space<vmem>>, vector<32x128xf32>
    %c0_1 = arith.constant 0 : index
    %c0_2 = arith.constant 0 : index
    %1 = vector.load %arg3[%c0_1, %c0_2] : memref<32x128xf32, #tpu.memory_space<vmem>>, vector<32x128xf32>
    %c0_3 = arith.constant 0 : index
    %c0_4 = arith.constant 0 : index
    %2 = vector.load %arg4[%c0_3, %c0_4] : memref<1x128xf32, #tpu.memory_space<vmem>>, vector<1x128xf32>
    %c0_5 = arith.constant 0 : index
    %c0_6 = arith.constant 0 : index
    %3 = vector.load %arg5[%c0_5, %c0_6] : memref<64x128xf32, #tpu.memory_space<vmem>>, vector<64x128xf32>
    %c0_7 = arith.constant 0 : index
    %c0_8 = arith.constant 0 : index
    %4 = vector.load %arg6[%c0_7, %c0_8] : memref<1x128xf32, #tpu.memory_space<vmem>>, vector<1x128xf32>
    %c0_9 = arith.constant 0 : index
    %c0_10 = arith.constant 0 : index
    %5 = vector.load %arg1[%c0_9, %c0_10] : memref<16x32xf32, #tpu.memory_space<vmem>>, vector<16x32xf32>
    %cst = arith.constant dense<0.000000e+00> : vector<16x128xf32>
    %6 = tpu.matmul %5, %0, %cst {dimension_numbers = #tpu.dot_dimension_numbers<[1], [0], [0], [1], [0, 0, 1, 1], [], []>} : vector<16x32xf32>, vector<32x128xf32>, vector<16x128xf32> -> vector<16x128xf32>
    %7 = vector.broadcast %2 : vector<1x128xf32> to vector<16x128xf32>
    %8 = arith.addf %6, %7 : vector<16x128xf32>
    %cst_11 = arith.constant 0.000000e+00 : f32
    %9 = vector.broadcast %cst_11 : f32 to vector<2x32xf32>
    %cst_12 = arith.constant 0.000000e+00 : f32
    %10 = vector.broadcast %cst_12 : f32 to vector<2x32xf32>
    %cst_13 = arith.constant 0.000000e+00 : f32
    %11 = vector.broadcast %cst_13 : f32 to vector<2x32xf32>
    %cst_14 = arith.constant 0.000000e+00 : f32
    %12 = vector.broadcast %cst_14 : f32 to vector<2x32xf32>
    %13 = vector.extract_strided_slice %8 {offsets = [0, 0], sizes = [2, 128], strides = [1, 1]} : vector<16x128xf32> to vector<2x128xf32>
    %cst_15 = arith.constant dense<0.000000e+00> : vector<2x128xf32>
    %14 = tpu.matmul %9, %1, %cst_15 {dimension_numbers = #tpu.dot_dimension_numbers<[1], [0], [0], [1], [0, 0, 1, 1], [], []>} : vector<2x32xf32>, vector<32x128xf32>, vector<2x128xf32> -> vector<2x128xf32>
    %15 = arith.addf %13, %14 : vector<2x128xf32>
    %16 = vector.extract_strided_slice %15 {offsets = [0, 0], sizes = [2, 96], strides = [1, 1]} : vector<2x128xf32> to vector<2x96xf32>
    %17 = arith.negf %16 : vector<2x96xf32>
    %18 = math.exp %17 : vector<2x96xf32>
    %cst_16 = arith.constant 1.000000e+00 : f32
    %19 = vector.broadcast %cst_16 : f32 to vector<2x96xf32>
    %20 = arith.addf %19, %18 : vector<2x96xf32>
    %21 = arith.divf %19, %20 : vector<2x96xf32>
    %22 = vector.extract_strided_slice %21 {offsets = [0, 0], sizes = [2, 32], strides = [1, 1]} : vector<2x96xf32> to vector<2x32xf32>
    %23 = vector.extract_strided_slice %21 {offsets = [0, 32], sizes = [2, 32], strides = [1, 1]} : vector<2x96xf32> to vector<2x32xf32>
    %24 = vector.extract_strided_slice %21 {offsets = [0, 64], sizes = [2, 32], strides = [1, 1]} : vector<2x96xf32> to vector<2x32xf32>
    %25 = vector.extract_strided_slice %15 {offsets = [0, 96], sizes = [2, 32], strides = [1, 1]} : vector<2x128xf32> to vector<2x32xf32>
    %26 = math.tanh %25 : vector<2x32xf32>
    %27 = arith.mulf %23, %11 : vector<2x32xf32>
    %28 = arith.mulf %22, %26 : vector<2x32xf32>
    %29 = arith.addf %27, %28 : vector<2x32xf32>
    %30 = math.tanh %29 : vector<2x32xf32>
    %31 = arith.mulf %24, %30 : vector<2x32xf32>
    %32 = vector.extract_strided_slice %8 {offsets = [2, 0], sizes = [2, 128], strides = [1, 1]} : vector<16x128xf32> to vector<2x128xf32>
    %cst_17 = arith.constant dense<0.000000e+00> : vector<2x128xf32>
    %33 = tpu.matmul %31, %1, %cst_17 {dimension_numbers = #tpu.dot_dimension_numbers<[1], [0], [0], [1], [0, 0, 1, 1], [], []>} : vector<2x32xf32>, vector<32x128xf32>, vector<2x128xf32> -> vector<2x128xf32>
    %34 = arith.addf %32, %33 : vector<2x128xf32>
    %35 = tpu.concatenate %31, %10 in 1 : vector<2x32xf32>, vector<2x32xf32> -> vector<2x64xf32>
    %cst_18 = arith.constant dense<0.000000e+00> : vector<2x128xf32>
    %36 = tpu.matmul %35, %3, %cst_18 {dimension_numbers = #tpu.dot_dimension_numbers<[1], [0], [0], [1], [0, 0, 1, 1], [], []>} : vector<2x64xf32>, vector<64x128xf32>, vector<2x128xf32> -> vector<2x128xf32>
    %37 = vector.broadcast %4 : vector<1x128xf32> to vector<2x128xf32>
    %38 = arith.addf %36, %37 : vector<2x128xf32>
    %39 = tpu.concatenate %34, %38 in 0 : vector<2x128xf32>, vector<2x128xf32> -> vector<4x128xf32>
    %40 = tpu.concatenate %29, %12 in 0 : vector<2x32xf32>, vector<2x32xf32> -> vector<4x32xf32>
    %41 = vector.extract_strided_slice %39 {offsets = [0, 0], sizes = [4, 96], strides = [1, 1]} : vector<4x128xf32> to vector<4x96xf32>
    %42 = arith.negf %41 : vector<4x96xf32>
    %43 = math.exp %42 : vector<4x96xf32>
    %cst_19 = arith.constant 1.000000e+00 : f32
    %44 = vector.broadcast %cst_19 : f32 to vector<4x96xf32>
    %45 = arith.addf %44, %43 : vector<4x96xf32>
    %46 = arith.divf %44, %45 : vector<4x96xf32>
    %47 = vector.extract_strided_slice %46 {offsets = [0, 0], sizes = [4, 32], strides = [1, 1]} : vector<4x96xf32> to vector<4x32xf32>
    %48 = vector.extract_strided_slice %46 {offsets = [0, 32], sizes = [4, 32], strides = [1, 1]} : vector<4x96xf32> to vector<4x32xf32>
    %49 = vector.extract_strided_slice %46 {offsets = [0, 64], sizes = [4, 32], strides = [1, 1]} : vector<4x96xf32> to vector<4x32xf32>
    %50 = vector.extract_strided_slice %39 {offsets = [0, 96], sizes = [4, 32], strides = [1, 1]} : vector<4x128xf32> to vector<4x32xf32>
    %51 = math.tanh %50 : vector<4x32xf32>
    %52 = arith.mulf %48, %40 : vector<4x32xf32>
    %53 = arith.mulf %47, %51 : vector<4x32xf32>
    %54 = arith.addf %52, %53 : vector<4x32xf32>
    %55 = math.tanh %54 : vector<4x32xf32>
    %56 = arith.mulf %49, %55 : vector<4x32xf32>
    %57 = vector.extract_strided_slice %56 {offsets = [0, 0], sizes = [2, 32], strides = [1, 1]} : vector<4x32xf32> to vector<2x32xf32>
    %58 = vector.extract_strided_slice %54 {offsets = [0, 0], sizes = [2, 32], strides = [1, 1]} : vector<4x32xf32> to vector<2x32xf32>
    %59 = vector.extract_strided_slice %56 {offsets = [2, 0], sizes = [2, 32], strides = [1, 1]} : vector<4x32xf32> to vector<2x32xf32>
    %60 = vector.extract_strided_slice %54 {offsets = [2, 0], sizes = [2, 32], strides = [1, 1]} : vector<4x32xf32> to vector<2x32xf32>
    %61 = vector.extract_strided_slice %8 {offsets = [4, 0], sizes = [2, 128], strides = [1, 1]} : vector<16x128xf32> to vector<2x128xf32>
    %cst_20 = arith.constant dense<0.000000e+00> : vector<2x128xf32>
    %62 = tpu.matmul %57, %1, %cst_20 {dimension_numbers = #tpu.dot_dimension_numbers<[1], [0], [0], [1], [0, 0, 1, 1], [], []>} : vector<2x32xf32>, vector<32x128xf32>, vector<2x128xf32> -> vector<2x128xf32>
    %63 = arith.addf %61, %62 : vector<2x128xf32>
    %64 = tpu.concatenate %57, %59 in 1 : vector<2x32xf32>, vector<2x32xf32> -> vector<2x64xf32>
    %cst_21 = arith.constant dense<0.000000e+00> : vector<2x128xf32>
    %65 = tpu.matmul %64, %3, %cst_21 {dimension_numbers = #tpu.dot_dimension_numbers<[1], [0], [0], [1], [0, 0, 1, 1], [], []>} : vector<2x64xf32>, vector<64x128xf32>, vector<2x128xf32> -> vector<2x128xf32>
    %66 = vector.broadcast %4 : vector<1x128xf32> to vector<2x128xf32>
    %67 = arith.addf %65, %66 : vector<2x128xf32>
    %68 = tpu.concatenate %63, %67 in 0 : vector<2x128xf32>, vector<2x128xf32> -> vector<4x128xf32>
    %69 = tpu.concatenate %58, %60 in 0 : vector<2x32xf32>, vector<2x32xf32> -> vector<4x32xf32>
    %70 = vector.extract_strided_slice %68 {offsets = [0, 0], sizes = [4, 96], strides = [1, 1]} : vector<4x128xf32> to vector<4x96xf32>
    %71 = arith.negf %70 : vector<4x96xf32>
    %72 = math.exp %71 : vector<4x96xf32>
    %cst_22 = arith.constant 1.000000e+00 : f32
    %73 = vector.broadcast %cst_22 : f32 to vector<4x96xf32>
    %74 = arith.addf %73, %72 : vector<4x96xf32>
    %75 = arith.divf %73, %74 : vector<4x96xf32>
    %76 = vector.extract_strided_slice %75 {offsets = [0, 0], sizes = [4, 32], strides = [1, 1]} : vector<4x96xf32> to vector<4x32xf32>
    %77 = vector.extract_strided_slice %75 {offsets = [0, 32], sizes = [4, 32], strides = [1, 1]} : vector<4x96xf32> to vector<4x32xf32>
    %78 = vector.extract_strided_slice %75 {offsets = [0, 64], sizes = [4, 32], strides = [1, 1]} : vector<4x96xf32> to vector<4x32xf32>
    %79 = vector.extract_strided_slice %68 {offsets = [0, 96], sizes = [4, 32], strides = [1, 1]} : vector<4x128xf32> to vector<4x32xf32>
    %80 = math.tanh %79 : vector<4x32xf32>
    %81 = arith.mulf %77, %69 : vector<4x32xf32>
    %82 = arith.mulf %76, %80 : vector<4x32xf32>
    %83 = arith.addf %81, %82 : vector<4x32xf32>
    %84 = math.tanh %83 : vector<4x32xf32>
    %85 = arith.mulf %78, %84 : vector<4x32xf32>
    %86 = vector.extract_strided_slice %85 {offsets = [0, 0], sizes = [2, 32], strides = [1, 1]} : vector<4x32xf32> to vector<2x32xf32>
    %87 = vector.extract_strided_slice %83 {offsets = [0, 0], sizes = [2, 32], strides = [1, 1]} : vector<4x32xf32> to vector<2x32xf32>
    %88 = vector.extract_strided_slice %85 {offsets = [2, 0], sizes = [2, 32], strides = [1, 1]} : vector<4x32xf32> to vector<2x32xf32>
    %89 = vector.extract_strided_slice %83 {offsets = [2, 0], sizes = [2, 32], strides = [1, 1]} : vector<4x32xf32> to vector<2x32xf32>
    %90 = vector.extract_strided_slice %8 {offsets = [6, 0], sizes = [2, 128], strides = [1, 1]} : vector<16x128xf32> to vector<2x128xf32>
    %cst_23 = arith.constant dense<0.000000e+00> : vector<2x128xf32>
    %91 = tpu.matmul %86, %1, %cst_23 {dimension_numbers = #tpu.dot_dimension_numbers<[1], [0], [0], [1], [0, 0, 1, 1], [], []>} : vector<2x32xf32>, vector<32x128xf32>, vector<2x128xf32> -> vector<2x128xf32>
    %92 = arith.addf %90, %91 : vector<2x128xf32>
    %93 = tpu.concatenate %86, %88 in 1 : vector<2x32xf32>, vector<2x32xf32> -> vector<2x64xf32>
    %cst_24 = arith.constant dense<0.000000e+00> : vector<2x128xf32>
    %94 = tpu.matmul %93, %3, %cst_24 {dimension_numbers = #tpu.dot_dimension_numbers<[1], [0], [0], [1], [0, 0, 1, 1], [], []>} : vector<2x64xf32>, vector<64x128xf32>, vector<2x128xf32> -> vector<2x128xf32>
    %95 = vector.broadcast %4 : vector<1x128xf32> to vector<2x128xf32>
    %96 = arith.addf %94, %95 : vector<2x128xf32>
    %97 = tpu.concatenate %92, %96 in 0 : vector<2x128xf32>, vector<2x128xf32> -> vector<4x128xf32>
    %98 = tpu.concatenate %87, %89 in 0 : vector<2x32xf32>, vector<2x32xf32> -> vector<4x32xf32>
    %99 = vector.extract_strided_slice %97 {offsets = [0, 0], sizes = [4, 96], strides = [1, 1]} : vector<4x128xf32> to vector<4x96xf32>
    %100 = arith.negf %99 : vector<4x96xf32>
    %101 = math.exp %100 : vector<4x96xf32>
    %cst_25 = arith.constant 1.000000e+00 : f32
    %102 = vector.broadcast %cst_25 : f32 to vector<4x96xf32>
    %103 = arith.addf %102, %101 : vector<4x96xf32>
    %104 = arith.divf %102, %103 : vector<4x96xf32>
    %105 = vector.extract_strided_slice %104 {offsets = [0, 0], sizes = [4, 32], strides = [1, 1]} : vector<4x96xf32> to vector<4x32xf32>
    %106 = vector.extract_strided_slice %104 {offsets = [0, 32], sizes = [4, 32], strides = [1, 1]} : vector<4x96xf32> to vector<4x32xf32>
    %107 = vector.extract_strided_slice %104 {offsets = [0, 64], sizes = [4, 32], strides = [1, 1]} : vector<4x96xf32> to vector<4x32xf32>
    %108 = vector.extract_strided_slice %97 {offsets = [0, 96], sizes = [4, 32], strides = [1, 1]} : vector<4x128xf32> to vector<4x32xf32>
    %109 = math.tanh %108 : vector<4x32xf32>
    %110 = arith.mulf %106, %98 : vector<4x32xf32>
    %111 = arith.mulf %105, %109 : vector<4x32xf32>
    %112 = arith.addf %110, %111 : vector<4x32xf32>
    %113 = math.tanh %112 : vector<4x32xf32>
    %114 = arith.mulf %107, %113 : vector<4x32xf32>
    %115 = vector.extract_strided_slice %114 {offsets = [0, 0], sizes = [2, 32], strides = [1, 1]} : vector<4x32xf32> to vector<2x32xf32>
    %116 = vector.extract_strided_slice %112 {offsets = [0, 0], sizes = [2, 32], strides = [1, 1]} : vector<4x32xf32> to vector<2x32xf32>
    %117 = vector.extract_strided_slice %114 {offsets = [2, 0], sizes = [2, 32], strides = [1, 1]} : vector<4x32xf32> to vector<2x32xf32>
    %118 = vector.extract_strided_slice %112 {offsets = [2, 0], sizes = [2, 32], strides = [1, 1]} : vector<4x32xf32> to vector<2x32xf32>
    %119 = vector.extract_strided_slice %8 {offsets = [8, 0], sizes = [2, 128], strides = [1, 1]} : vector<16x128xf32> to vector<2x128xf32>
    %cst_26 = arith.constant dense<0.000000e+00> : vector<2x128xf32>
    %120 = tpu.matmul %115, %1, %cst_26 {dimension_numbers = #tpu.dot_dimension_numbers<[1], [0], [0], [1], [0, 0, 1, 1], [], []>} : vector<2x32xf32>, vector<32x128xf32>, vector<2x128xf32> -> vector<2x128xf32>
    %121 = arith.addf %119, %120 : vector<2x128xf32>
    %122 = tpu.concatenate %115, %117 in 1 : vector<2x32xf32>, vector<2x32xf32> -> vector<2x64xf32>
    %cst_27 = arith.constant dense<0.000000e+00> : vector<2x128xf32>
    %123 = tpu.matmul %122, %3, %cst_27 {dimension_numbers = #tpu.dot_dimension_numbers<[1], [0], [0], [1], [0, 0, 1, 1], [], []>} : vector<2x64xf32>, vector<64x128xf32>, vector<2x128xf32> -> vector<2x128xf32>
    %124 = vector.broadcast %4 : vector<1x128xf32> to vector<2x128xf32>
    %125 = arith.addf %123, %124 : vector<2x128xf32>
    %126 = tpu.concatenate %121, %125 in 0 : vector<2x128xf32>, vector<2x128xf32> -> vector<4x128xf32>
    %127 = tpu.concatenate %116, %118 in 0 : vector<2x32xf32>, vector<2x32xf32> -> vector<4x32xf32>
    %128 = vector.extract_strided_slice %126 {offsets = [0, 0], sizes = [4, 96], strides = [1, 1]} : vector<4x128xf32> to vector<4x96xf32>
    %129 = arith.negf %128 : vector<4x96xf32>
    %130 = math.exp %129 : vector<4x96xf32>
    %cst_28 = arith.constant 1.000000e+00 : f32
    %131 = vector.broadcast %cst_28 : f32 to vector<4x96xf32>
    %132 = arith.addf %131, %130 : vector<4x96xf32>
    %133 = arith.divf %131, %132 : vector<4x96xf32>
    %134 = vector.extract_strided_slice %133 {offsets = [0, 0], sizes = [4, 32], strides = [1, 1]} : vector<4x96xf32> to vector<4x32xf32>
    %135 = vector.extract_strided_slice %133 {offsets = [0, 32], sizes = [4, 32], strides = [1, 1]} : vector<4x96xf32> to vector<4x32xf32>
    %136 = vector.extract_strided_slice %133 {offsets = [0, 64], sizes = [4, 32], strides = [1, 1]} : vector<4x96xf32> to vector<4x32xf32>
    %137 = vector.extract_strided_slice %126 {offsets = [0, 96], sizes = [4, 32], strides = [1, 1]} : vector<4x128xf32> to vector<4x32xf32>
    %138 = math.tanh %137 : vector<4x32xf32>
    %139 = arith.mulf %135, %127 : vector<4x32xf32>
    %140 = arith.mulf %134, %138 : vector<4x32xf32>
    %141 = arith.addf %139, %140 : vector<4x32xf32>
    %142 = math.tanh %141 : vector<4x32xf32>
    %143 = arith.mulf %136, %142 : vector<4x32xf32>
    %144 = vector.extract_strided_slice %143 {offsets = [0, 0], sizes = [2, 32], strides = [1, 1]} : vector<4x32xf32> to vector<2x32xf32>
    %145 = vector.extract_strided_slice %141 {offsets = [0, 0], sizes = [2, 32], strides = [1, 1]} : vector<4x32xf32> to vector<2x32xf32>
    %146 = vector.extract_strided_slice %143 {offsets = [2, 0], sizes = [2, 32], strides = [1, 1]} : vector<4x32xf32> to vector<2x32xf32>
    %147 = vector.extract_strided_slice %141 {offsets = [2, 0], sizes = [2, 32], strides = [1, 1]} : vector<4x32xf32> to vector<2x32xf32>
    %148 = vector.extract_strided_slice %8 {offsets = [10, 0], sizes = [2, 128], strides = [1, 1]} : vector<16x128xf32> to vector<2x128xf32>
    %cst_29 = arith.constant dense<0.000000e+00> : vector<2x128xf32>
    %149 = tpu.matmul %144, %1, %cst_29 {dimension_numbers = #tpu.dot_dimension_numbers<[1], [0], [0], [1], [0, 0, 1, 1], [], []>} : vector<2x32xf32>, vector<32x128xf32>, vector<2x128xf32> -> vector<2x128xf32>
    %150 = arith.addf %148, %149 : vector<2x128xf32>
    %151 = tpu.concatenate %144, %146 in 1 : vector<2x32xf32>, vector<2x32xf32> -> vector<2x64xf32>
    %cst_30 = arith.constant dense<0.000000e+00> : vector<2x128xf32>
    %152 = tpu.matmul %151, %3, %cst_30 {dimension_numbers = #tpu.dot_dimension_numbers<[1], [0], [0], [1], [0, 0, 1, 1], [], []>} : vector<2x64xf32>, vector<64x128xf32>, vector<2x128xf32> -> vector<2x128xf32>
    %153 = vector.broadcast %4 : vector<1x128xf32> to vector<2x128xf32>
    %154 = arith.addf %152, %153 : vector<2x128xf32>
    %155 = tpu.concatenate %150, %154 in 0 : vector<2x128xf32>, vector<2x128xf32> -> vector<4x128xf32>
    %156 = tpu.concatenate %145, %147 in 0 : vector<2x32xf32>, vector<2x32xf32> -> vector<4x32xf32>
    %157 = vector.extract_strided_slice %155 {offsets = [0, 0], sizes = [4, 96], strides = [1, 1]} : vector<4x128xf32> to vector<4x96xf32>
    %158 = arith.negf %157 : vector<4x96xf32>
    %159 = math.exp %158 : vector<4x96xf32>
    %cst_31 = arith.constant 1.000000e+00 : f32
    %160 = vector.broadcast %cst_31 : f32 to vector<4x96xf32>
    %161 = arith.addf %160, %159 : vector<4x96xf32>
    %162 = arith.divf %160, %161 : vector<4x96xf32>
    %163 = vector.extract_strided_slice %162 {offsets = [0, 0], sizes = [4, 32], strides = [1, 1]} : vector<4x96xf32> to vector<4x32xf32>
    %164 = vector.extract_strided_slice %162 {offsets = [0, 32], sizes = [4, 32], strides = [1, 1]} : vector<4x96xf32> to vector<4x32xf32>
    %165 = vector.extract_strided_slice %162 {offsets = [0, 64], sizes = [4, 32], strides = [1, 1]} : vector<4x96xf32> to vector<4x32xf32>
    %166 = vector.extract_strided_slice %155 {offsets = [0, 96], sizes = [4, 32], strides = [1, 1]} : vector<4x128xf32> to vector<4x32xf32>
    %167 = math.tanh %166 : vector<4x32xf32>
    %168 = arith.mulf %164, %156 : vector<4x32xf32>
    %169 = arith.mulf %163, %167 : vector<4x32xf32>
    %170 = arith.addf %168, %169 : vector<4x32xf32>
    %171 = math.tanh %170 : vector<4x32xf32>
    %172 = arith.mulf %165, %171 : vector<4x32xf32>
    %173 = vector.extract_strided_slice %172 {offsets = [0, 0], sizes = [2, 32], strides = [1, 1]} : vector<4x32xf32> to vector<2x32xf32>
    %174 = vector.extract_strided_slice %170 {offsets = [0, 0], sizes = [2, 32], strides = [1, 1]} : vector<4x32xf32> to vector<2x32xf32>
    %175 = vector.extract_strided_slice %172 {offsets = [2, 0], sizes = [2, 32], strides = [1, 1]} : vector<4x32xf32> to vector<2x32xf32>
    %176 = vector.extract_strided_slice %170 {offsets = [2, 0], sizes = [2, 32], strides = [1, 1]} : vector<4x32xf32> to vector<2x32xf32>
    %177 = vector.extract_strided_slice %8 {offsets = [12, 0], sizes = [2, 128], strides = [1, 1]} : vector<16x128xf32> to vector<2x128xf32>
    %cst_32 = arith.constant dense<0.000000e+00> : vector<2x128xf32>
    %178 = tpu.matmul %173, %1, %cst_32 {dimension_numbers = #tpu.dot_dimension_numbers<[1], [0], [0], [1], [0, 0, 1, 1], [], []>} : vector<2x32xf32>, vector<32x128xf32>, vector<2x128xf32> -> vector<2x128xf32>
    %179 = arith.addf %177, %178 : vector<2x128xf32>
    %180 = tpu.concatenate %173, %175 in 1 : vector<2x32xf32>, vector<2x32xf32> -> vector<2x64xf32>
    %cst_33 = arith.constant dense<0.000000e+00> : vector<2x128xf32>
    %181 = tpu.matmul %180, %3, %cst_33 {dimension_numbers = #tpu.dot_dimension_numbers<[1], [0], [0], [1], [0, 0, 1, 1], [], []>} : vector<2x64xf32>, vector<64x128xf32>, vector<2x128xf32> -> vector<2x128xf32>
    %182 = vector.broadcast %4 : vector<1x128xf32> to vector<2x128xf32>
    %183 = arith.addf %181, %182 : vector<2x128xf32>
    %184 = tpu.concatenate %179, %183 in 0 : vector<2x128xf32>, vector<2x128xf32> -> vector<4x128xf32>
    %185 = tpu.concatenate %174, %176 in 0 : vector<2x32xf32>, vector<2x32xf32> -> vector<4x32xf32>
    %186 = vector.extract_strided_slice %184 {offsets = [0, 0], sizes = [4, 96], strides = [1, 1]} : vector<4x128xf32> to vector<4x96xf32>
    %187 = arith.negf %186 : vector<4x96xf32>
    %188 = math.exp %187 : vector<4x96xf32>
    %cst_34 = arith.constant 1.000000e+00 : f32
    %189 = vector.broadcast %cst_34 : f32 to vector<4x96xf32>
    %190 = arith.addf %189, %188 : vector<4x96xf32>
    %191 = arith.divf %189, %190 : vector<4x96xf32>
    %192 = vector.extract_strided_slice %191 {offsets = [0, 0], sizes = [4, 32], strides = [1, 1]} : vector<4x96xf32> to vector<4x32xf32>
    %193 = vector.extract_strided_slice %191 {offsets = [0, 32], sizes = [4, 32], strides = [1, 1]} : vector<4x96xf32> to vector<4x32xf32>
    %194 = vector.extract_strided_slice %191 {offsets = [0, 64], sizes = [4, 32], strides = [1, 1]} : vector<4x96xf32> to vector<4x32xf32>
    %195 = vector.extract_strided_slice %184 {offsets = [0, 96], sizes = [4, 32], strides = [1, 1]} : vector<4x128xf32> to vector<4x32xf32>
    %196 = math.tanh %195 : vector<4x32xf32>
    %197 = arith.mulf %193, %185 : vector<4x32xf32>
    %198 = arith.mulf %192, %196 : vector<4x32xf32>
    %199 = arith.addf %197, %198 : vector<4x32xf32>
    %200 = math.tanh %199 : vector<4x32xf32>
    %201 = arith.mulf %194, %200 : vector<4x32xf32>
    %202 = vector.extract_strided_slice %201 {offsets = [0, 0], sizes = [2, 32], strides = [1, 1]} : vector<4x32xf32> to vector<2x32xf32>
    %203 = vector.extract_strided_slice %199 {offsets = [0, 0], sizes = [2, 32], strides = [1, 1]} : vector<4x32xf32> to vector<2x32xf32>
    %204 = vector.extract_strided_slice %201 {offsets = [2, 0], sizes = [2, 32], strides = [1, 1]} : vector<4x32xf32> to vector<2x32xf32>
    %205 = vector.extract_strided_slice %199 {offsets = [2, 0], sizes = [2, 32], strides = [1, 1]} : vector<4x32xf32> to vector<2x32xf32>
    %206 = vector.extract_strided_slice %8 {offsets = [14, 0], sizes = [2, 128], strides = [1, 1]} : vector<16x128xf32> to vector<2x128xf32>
    %cst_35 = arith.constant dense<0.000000e+00> : vector<2x128xf32>
    %207 = tpu.matmul %202, %1, %cst_35 {dimension_numbers = #tpu.dot_dimension_numbers<[1], [0], [0], [1], [0, 0, 1, 1], [], []>} : vector<2x32xf32>, vector<32x128xf32>, vector<2x128xf32> -> vector<2x128xf32>
    %208 = arith.addf %206, %207 : vector<2x128xf32>
    %209 = tpu.concatenate %202, %204 in 1 : vector<2x32xf32>, vector<2x32xf32> -> vector<2x64xf32>
    %cst_36 = arith.constant dense<0.000000e+00> : vector<2x128xf32>
    %210 = tpu.matmul %209, %3, %cst_36 {dimension_numbers = #tpu.dot_dimension_numbers<[1], [0], [0], [1], [0, 0, 1, 1], [], []>} : vector<2x64xf32>, vector<64x128xf32>, vector<2x128xf32> -> vector<2x128xf32>
    %211 = vector.broadcast %4 : vector<1x128xf32> to vector<2x128xf32>
    %212 = arith.addf %210, %211 : vector<2x128xf32>
    %213 = tpu.concatenate %208, %212 in 0 : vector<2x128xf32>, vector<2x128xf32> -> vector<4x128xf32>
    %214 = tpu.concatenate %203, %205 in 0 : vector<2x32xf32>, vector<2x32xf32> -> vector<4x32xf32>
    %215 = vector.extract_strided_slice %213 {offsets = [0, 0], sizes = [4, 96], strides = [1, 1]} : vector<4x128xf32> to vector<4x96xf32>
    %216 = arith.negf %215 : vector<4x96xf32>
    %217 = math.exp %216 : vector<4x96xf32>
    %cst_37 = arith.constant 1.000000e+00 : f32
    %218 = vector.broadcast %cst_37 : f32 to vector<4x96xf32>
    %219 = arith.addf %218, %217 : vector<4x96xf32>
    %220 = arith.divf %218, %219 : vector<4x96xf32>
    %221 = vector.extract_strided_slice %220 {offsets = [0, 0], sizes = [4, 32], strides = [1, 1]} : vector<4x96xf32> to vector<4x32xf32>
    %222 = vector.extract_strided_slice %220 {offsets = [0, 32], sizes = [4, 32], strides = [1, 1]} : vector<4x96xf32> to vector<4x32xf32>
    %223 = vector.extract_strided_slice %220 {offsets = [0, 64], sizes = [4, 32], strides = [1, 1]} : vector<4x96xf32> to vector<4x32xf32>
    %224 = vector.extract_strided_slice %213 {offsets = [0, 96], sizes = [4, 32], strides = [1, 1]} : vector<4x128xf32> to vector<4x32xf32>
    %225 = math.tanh %224 : vector<4x32xf32>
    %226 = arith.mulf %222, %214 : vector<4x32xf32>
    %227 = arith.mulf %221, %225 : vector<4x32xf32>
    %228 = arith.addf %226, %227 : vector<4x32xf32>
    %229 = math.tanh %228 : vector<4x32xf32>
    %230 = arith.mulf %223, %229 : vector<4x32xf32>
    %231 = vector.extract_strided_slice %230 {offsets = [0, 0], sizes = [2, 32], strides = [1, 1]} : vector<4x32xf32> to vector<2x32xf32>
    %232 = vector.extract_strided_slice %228 {offsets = [0, 0], sizes = [2, 32], strides = [1, 1]} : vector<4x32xf32> to vector<2x32xf32>
    %233 = vector.extract_strided_slice %230 {offsets = [2, 0], sizes = [2, 32], strides = [1, 1]} : vector<4x32xf32> to vector<2x32xf32>
    %234 = vector.extract_strided_slice %228 {offsets = [2, 0], sizes = [2, 32], strides = [1, 1]} : vector<4x32xf32> to vector<2x32xf32>
    %235 = tpu.concatenate %231, %233 in 1 : vector<2x32xf32>, vector<2x32xf32> -> vector<2x64xf32>
    %cst_38 = arith.constant dense<0.000000e+00> : vector<2x128xf32>
    %236 = tpu.matmul %235, %3, %cst_38 {dimension_numbers = #tpu.dot_dimension_numbers<[1], [0], [0], [1], [0, 0, 1, 1], [], []>} : vector<2x64xf32>, vector<64x128xf32>, vector<2x128xf32> -> vector<2x128xf32>
    %237 = vector.broadcast %4 : vector<1x128xf32> to vector<2x128xf32>
    %238 = arith.addf %236, %237 : vector<2x128xf32>
    %239 = vector.extract_strided_slice %238 {offsets = [0, 0], sizes = [2, 96], strides = [1, 1]} : vector<2x128xf32> to vector<2x96xf32>
    %240 = arith.negf %239 : vector<2x96xf32>
    %241 = math.exp %240 : vector<2x96xf32>
    %cst_39 = arith.constant 1.000000e+00 : f32
    %242 = vector.broadcast %cst_39 : f32 to vector<2x96xf32>
    %243 = arith.addf %242, %241 : vector<2x96xf32>
    %244 = arith.divf %242, %243 : vector<2x96xf32>
    %245 = vector.extract_strided_slice %244 {offsets = [0, 0], sizes = [2, 32], strides = [1, 1]} : vector<2x96xf32> to vector<2x32xf32>
    %246 = vector.extract_strided_slice %244 {offsets = [0, 32], sizes = [2, 32], strides = [1, 1]} : vector<2x96xf32> to vector<2x32xf32>
    %247 = vector.extract_strided_slice %244 {offsets = [0, 64], sizes = [2, 32], strides = [1, 1]} : vector<2x96xf32> to vector<2x32xf32>
    %248 = vector.extract_strided_slice %238 {offsets = [0, 96], sizes = [2, 32], strides = [1, 1]} : vector<2x128xf32> to vector<2x32xf32>
    %249 = math.tanh %248 : vector<2x32xf32>
    %250 = arith.mulf %246, %234 : vector<2x32xf32>
    %251 = arith.mulf %245, %249 : vector<2x32xf32>
    %252 = arith.addf %250, %251 : vector<2x32xf32>
    %253 = math.tanh %252 : vector<2x32xf32>
    %254 = arith.mulf %247, %253 : vector<2x32xf32>
    %255 = tpu.concatenate %59, %88, %117, %146, %175, %204, %233, %254 in 1 : vector<2x32xf32>, vector<2x32xf32>, vector<2x32xf32>, vector<2x32xf32>, vector<2x32xf32>, vector<2x32xf32>, vector<2x32xf32>, vector<2x32xf32> -> vector<2x256xf32>
    %c0_40 = arith.constant 0 : index
    %c0_41 = arith.constant 0 : index
    %256 = vector.load %arg7[%c0_40, %c0_41] : memref<2x256xf32, #tpu.memory_space<vmem>>, vector<2x256xf32>
    tpu.vector_store %arg7[%c0_40, %c0_41], %255 {strides = array<i32>} : memref<2x256xf32, #tpu.memory_space<vmem>>, vector<2x256xf32>,
    %c0_42 = arith.constant 0 : index
    %c0_43 = arith.constant 0 : index
    %c0_44 = arith.constant 0 : index
    %257 = vector.load %arg8[%c0_42, %c0_43, %c0_44] : memref<2x2x32xf32, #tpu.memory_space<vmem>>, vector<1x2x32xf32>
    %258 = vector.shape_cast %257 : vector<1x2x32xf32> to vector<2x32xf32>
    %259 = vector.shape_cast %231 : vector<2x32xf32> to vector<1x2x32xf32>
    tpu.vector_store %arg8[%c0_42, %c0_43, %c0_44], %259 {strides = array<i32>} : memref<2x2x32xf32, #tpu.memory_space<vmem>>, vector<1x2x32xf32>,
    %c0_45 = arith.constant 0 : index
    %c0_46 = arith.constant 0 : index
    %c0_47 = arith.constant 0 : index
    %260 = vector.load %arg9[%c0_45, %c0_46, %c0_47] : memref<2x2x32xf32, #tpu.memory_space<vmem>>, vector<1x2x32xf32>
    %261 = vector.shape_cast %260 : vector<1x2x32xf32> to vector<2x32xf32>
    %262 = vector.shape_cast %232 : vector<2x32xf32> to vector<1x2x32xf32>
    tpu.vector_store %arg9[%c0_45, %c0_46, %c0_47], %262 {strides = array<i32>} : memref<2x2x32xf32, #tpu.memory_space<vmem>>, vector<1x2x32xf32>,
    %c1 = arith.constant 1 : index
    %c0_48 = arith.constant 0 : index
    %c0_49 = arith.constant 0 : index
    %263 = vector.load %arg8[%c1, %c0_48, %c0_49] : memref<2x2x32xf32, #tpu.memory_space<vmem>>, vector<1x2x32xf32>
    %264 = vector.shape_cast %263 : vector<1x2x32xf32> to vector<2x32xf32>
    %265 = vector.shape_cast %254 : vector<2x32xf32> to vector<1x2x32xf32>
    tpu.vector_store %arg8[%c1, %c0_48, %c0_49], %265 {strides = array<i32>} : memref<2x2x32xf32, #tpu.memory_space<vmem>>, vector<1x2x32xf32>,
    %c1_50 = arith.constant 1 : index
    %c0_51 = arith.constant 0 : index
    %c0_52 = arith.constant 0 : index
    %266 = vector.load %arg9[%c1_50, %c0_51, %c0_52] : memref<2x2x32xf32, #tpu.memory_space<vmem>>, vector<1x2x32xf32>
    %267 = vector.shape_cast %266 : vector<1x2x32xf32> to vector<2x32xf32>
    %268 = vector.shape_cast %252 : vector<2x32xf32> to vector<1x2x32xf32>
    tpu.vector_store %arg9[%c1_50, %c0_51, %c0_52], %268 {strides = array<i32>} : memref<2x2x32xf32, #tpu.memory_space<vmem>>, vector<1x2x32xf32>,
    return
  }
  func.func @transform_0(%arg0: i32) -> (i32, i32) {
    %c0_i32 = arith.constant 0 : i32
    %c0_i32_0 = arith.constant 0 : i32
    %c0_i32_1 = arith.constant 0 : i32
    return %c0_i32, %c0_i32_0 : i32, i32
  }
  func.func @transform_1(%arg0: i32) -> (i32, i32) {
    %c0_i32 = arith.constant 0 : i32
    %c0_i32_0 = arith.constant 0 : i32
    %c0_i32_1 = arith.constant 0 : i32
    return %c0_i32, %c0_i32_0 : i32, i32
  }
  func.func @transform_2(%arg0: i32) -> (i32, i32) {
    %c0_i32 = arith.constant 0 : i32
    %c0_i32_0 = arith.constant 0 : i32
    %c0_i32_1 = arith.constant 0 : i32
    return %c0_i32, %c0_i32_0 : i32, i32
  }
  func.func @transform_3(%arg0: i32) -> (i32, i32) {
    %c0_i32 = arith.constant 0 : i32
    %c0_i32_0 = arith.constant 0 : i32
    %c0_i32_1 = arith.constant 0 : i32
    return %c0_i32, %c0_i32_0 : i32, i32
  }
  func.func @transform_4(%arg0: i32) -> (i32, i32) {
    %c0_i32 = arith.constant 0 : i32
    %c0_i32_0 = arith.constant 0 : i32
    %c0_i32_1 = arith.constant 0 : i32
    return %c0_i32, %c0_i32_0 : i32, i32
  }
  func.func @transform_5(%arg0: i32) -> (i32, i32) {
    %c0_i32 = arith.constant 0 : i32
    %c0_i32_0 = arith.constant 0 : i32
    %c0_i32_1 = arith.constant 0 : i32
    return %c0_i32, %c0_i32_0 : i32, i32
  }
  func.func @transform_6(%arg0: i32) -> (i32, i32) {
    %c0_i32 = arith.constant 0 : i32
    %c0_i32_0 = arith.constant 0 : i32
    %c0_i32_1 = arith.constant 0 : i32
    return %c0_i32, %c0_i32_0 : i32, i32
  }
  func.func @transform_7(%arg0: i32) -> (i32, i32, i32) {
    %c0_i32 = arith.constant 0 : i32
    %c0_i32_0 = arith.constant 0 : i32
    %c0_i32_1 = arith.constant 0 : i32
    %c0_i32_2 = arith.constant 0 : i32
    return %c0_i32, %c0_i32_0, %c0_i32_1 : i32, i32, i32
  }
  func.func @transform_8(%arg0: i32) -> (i32, i32, i32) {
    %c0_i32 = arith.constant 0 : i32
    %c0_i32_0 = arith.constant 0 : i32
    %c0_i32_1 = arith.constant 0 : i32
    %c0_i32_2 = arith.constant 0 : i32
    return %c0_i32, %c0_i32_0, %c0_i32_1 : i32, i32, i32
  }
}

</mosaic_0001>

<llo_original>
// kernel: encoder_forward.1
$region0: #{encoder_forward.1}
  #allocation0 [shape = 'u32[]', space=smem, size = 0x4, offset = 0x4, fixed_abs, tag = 'smem constant byte address 0x4 - core index']
  #allocation1 [shape = 'u32[72,128]{1,0:T(1,128)}', space=vmem, size = 0x9000, scoped, tag = 'internal scratch']
  %s0 = inlined_call_operand.vmem [shape: f32[16,32], index: 0, kind: input, shape index: {}]
  %s1 = inlined_call_operand.vmem [shape: f32[32,128], index: 1, kind: input, shape index: {}]
  %s2 = inlined_call_operand.vmem [shape: f32[32,128], index: 2, kind: input, shape index: {}]
  %s3 = inlined_call_operand.vmem [shape: f32[1,128], index: 3, kind: input, shape index: {}]
  %s4 = inlined_call_operand.vmem [shape: f32[64,128], index: 4, kind: input, shape index: {}]
  %s5 = inlined_call_operand.vmem [shape: f32[1,128], index: 5, kind: input, shape index: {}]
  %s6 = inlined_call_operand.vmem [shape: f32[2,256], index: 6, kind: output, shape index: {0}]
  %s7 = inlined_call_operand.hbm [shape: f32[2,2,32], index: 7, kind: output, shape index: {1}]
  %s8 = inlined_call_operand.hbm [shape: f32[2,2,32], index: 8, kind: output, shape index: {2}]
  %9 = xla_tuple %s6, %s7, %s8
  %s10 = sld [smem:[#allocation0]]
  $region50: #{encoder_forward.1} parent=0
    _
  %s12 = ssub.s32 1, %s10
  %s13 = scalar_select 0, %s12, %s10
  $region1: #{encoder_forward.1} parent=0
    #allocation2 [shape = 'u8[2048]{0}', space=vmem, size = 0x800, scoped, tag = 'output window, operand 1, single buffered']
    #allocation3 [shape = 's32[1]{0}', space=sflag, size = 0x4, scoped, tag = 'scoped memory for encoder_forward.1']
    #allocation4 [shape = 'u8[2048]{0}', space=vmem, size = 0x800, scoped, tag = 'output window, operand 2, single buffered']
    #allocation5 [shape = 's32[1]{0}', space=sflag, size = 0x4, scoped, tag = 'scoped memory for encoder_forward.1']
    %14 = vsyncpa [#allocation3], 0
    %15 = vsyncpa [#allocation5], 0
    // Predicated region
    $region2: #{encoder_forward.1} parent=1 // pred_check
      _
    $region3: #{encoder_forward.1} parent=1 // pred_check_branch
      %17 = sbr.rel (0) target = $region5
    $region4: #{encoder_forward.1} parent=1 // pred_region
      _
    $region5: #{encoder_forward.1} parent=1 // pred_fallthru
      _
    // Predicated region
    $region6: #{encoder_forward.1} parent=1 // pred_check
      _
    $region7: #{encoder_forward.1} parent=1 // pred_check_branch
      %19 = sbr.rel (0) target = $region9
    $region8: #{encoder_forward.1} parent=1 // pred_region
      _
    $region9: #{encoder_forward.1} parent=1 // pred_fallthru
      _
    // Predicated region
    $region10: #{encoder_forward.1} parent=1 // pred_check
      _
    $region11: #{encoder_forward.1} parent=1 // pred_check_branch
      %21 = sbr.rel (0) target = $region13
    $region12: #{encoder_forward.1} parent=1 // pred_region
      _
    $region13: #{encoder_forward.1} parent=1 // pred_fallthru
      _
    // Predicated region
    $region14: #{encoder_forward.1} parent=1 // pred_check
      _
    $region15: #{encoder_forward.1} parent=1 // pred_check_branch
      %23 = sbr.rel (0) target = $region17
    $region16: #{encoder_forward.1} parent=1 // pred_region
      _
    $region17: #{encoder_forward.1} parent=1 // pred_fallthru
      _
    // Predicated region
    $region18: #{encoder_forward.1} parent=1 // pred_check
      _
    $region19: #{encoder_forward.1} parent=1 // pred_check_branch
      %25 = sbr.rel (0) target = $region21
    $region20: #{encoder_forward.1} parent=1 // pred_region
      _
    $region21: #{encoder_forward.1} parent=1 // pred_fallthru
      _
    // Predicated region
    $region22: #{encoder_forward.1} parent=1 // pred_check
      _
    $region23: #{encoder_forward.1} parent=1 // pred_check_branch
      %27 = sbr.rel (0) target = $region25
    $region24: #{encoder_forward.1} parent=1 // pred_region
      _
    $region25: #{encoder_forward.1} parent=1 // pred_fallthru
      _
    %v28 = vld [vmem:[%s1] sm:$0xff]
    %v29 = vld [vmem:[%s1 + $0x8] sm:$0xff]
    %v30 = vld [vmem:[%s1 + $0x10] sm:$0xff]
    %v31 = vld [vmem:[%s1 + $0x18] sm:$0xff]
    %v32 = vld [vmem:[%s2] sm:$0xff]
    %v33 = vld [vmem:[%s2 + $0x8] sm:$0xff]
    %v34 = vld [vmem:[%s2 + $0x10] sm:$0xff]
    %v35 = vld [vmem:[%s2 + $0x18] sm:$0xff]
    %v36 = vld [vmem:[%s3] sm:$0x1]
    %v37 = vld [vmem:[%s4] sm:$0xff]
    %v38 = vld [vmem:[%s4 + $0x8] sm:$0xff]
    %v39 = vld [vmem:[%s4 + $0x10] sm:$0xff]
    %v40 = vld [vmem:[%s4 + $0x18] sm:$0xff]
    %v41 = vld [vmem:[%s4 + $0x20] sm:$0xff]
    %v42 = vld [vmem:[%s4 + $0x28] sm:$0xff]
    %v43 = vld [vmem:[%s4 + $0x30] sm:$0xff]
    %v44 = vld [vmem:[%s4 + $0x38] sm:$0xff]
    %v45 = vld [vmem:[%s5] sm:$0x1]
    %v46 = vld [vmem:[%s0] sm:$0xff]
    %v47 = vld [vmem:[%s0 + $0x8] sm:$0xff]
    %v49 = vperm.slane %v36, 0
    %vm51 = vcmask 261120
    %v53 = vsel %vm51, %v46, 0
    %v56 = vsel %vm51, %v47, 0
    %58 = vmatpush.msra.mxu0 0.0
    %59 = vmatpush.msra.mxu0 0.0
    %60 = vmatpush.msra.mxu0 0.0
    %61 = vmatpush.msra.mxu0 0.0
    %62 = vmatpush.msra.mxu0 0.0
    %63 = vmatpush.msra.mxu0 0.0
    %64 = vmatpush.msra.mxu0 0.0
    %65 = vmatpush.msra.mxu0 0.0
    %66 = vmatpush.msra.mxu0 0.0
    %67 = vmatpush.msra.mxu0 0.0
    %68 = vmatpush.msra.mxu0 0.0
    %69 = vmatpush.msra.mxu0 0.0
    %70 = vmatpush.msra.mxu0 %v31
    %71 = vmatpush.msra.mxu0 %v30
    %72 = vmatpush.msra.mxu0 %v29
    %73 = vmatpush.msra.mxu0 %v28
    %74 = vmatmul.f32.gmra.mxu0 %v53
    %v75 = vpop.f32.mrf.mxu0
    %v76 = vadd.f32 %v49, %v75
    %77 = vmatmul.f32.gmra.mxu0 %v56
    %v78 = vpop.f32.mrf.mxu0
    %v79 = vadd.f32 %v49, %v78
    %80 = vdwg.mxu0
    %v82 = vsel %vm51, 0.0, 0
    %84 = vmatpush.msra.mxu0 0.0
    %85 = vmatpush.msra.mxu0 0.0
    %86 = vmatpush.msra.mxu0 0.0
    %87 = vmatpush.msra.mxu0 0.0
    %88 = vmatpush.msra.mxu0 0.0
    %89 = vmatpush.msra.mxu0 0.0
    %90 = vmatpush.msra.mxu0 0.0
    %91 = vmatpush.msra.mxu0 0.0
    %92 = vmatpush.msra.mxu0 0.0
    %93 = vmatpush.msra.mxu0 0.0
    %94 = vmatpush.msra.mxu0 0.0
    %95 = vmatpush.msra.mxu0 0.0
    %96 = vmatpush.msra.mxu0 %v35
    %97 = vmatpush.msra.mxu0 %v34
    %98 = vmatpush.msra.mxu0 %v33
    %99 = vmatpush.msra.mxu0 %v32
    %100 = vmatmul.f32.gmra.mxu0 %v82
    %v101 = vpop.f32.mrf.mxu0
    %v102 = vadd.f32 0.0, %v101
    %103 = vdwg.mxu0
    %v104 = vadd.f32 %v76, %v102
    %v105 = vxor.u32 %v104, 2147483648
    %v106 = vmul.f32 %v105, 1.442695
    %v107 = vpow.pop %v106
    %v108 = vadd.f32 %v107, 1.0
    %v109 = vrcp.pop %v108
    %v110 = vmul.f32 %v108, %v109
    %v111 = vsub.f32 1.0, %v110
    %v112 = vmul.f32 %v109, %v111
    %v113 = vadd.f32 %v109, %v112
    %vm114 = vweird.f32 %v108
    %vm115 = vweird.f32 %v109
    %vm116 = vmor %vm114, %vm115
    %v117 = vsel %vm116, %v109, %v113
    %v118 = vand.u32 2147483647, %v108
    %vm119 = vcmp.eq.f32.partialorder %v118, 8.507059e+37
    %v120 = vand.u32 %v108, 2147483648
    %v121 = vor.u32 1.1754944e-38, %v120
    %v122 = vsel %vm119, %v121, %v117
    %v123 = vmul.f32 1.0, %v122
    %v124 = vtanh.pop %v104
    %v125 = vmul.f32 %v123, 0.0
    %127 = vrot.lane.b32.xlu0 %v124, 32
    %v128 = vpop.permute.xlu0 %127
    %v130 = vmul.f32 %v123, %v128
    %132 = vrot.lane.b32.xlu0 %v130, 32
    %v133 = vpop.permute.xlu0 %132
    %v135 = vadd.f32 %v125, %v133
    %v136 = vtanh.pop %v135
    %138 = vrot.lane.b32.xlu0 %v136, 32
    %v139 = vpop.permute.xlu0 %138
    %v141 = vmul.f32 %v123, %v139
    %143 = vrot.lane.b32.xlu0 %v141, 64
    %v144 = vpop.permute.xlu0 %143
    %v145 = vsel %vm51, %v144, 0
    %147 = vmatpush.msra.mxu0 0.0
    %148 = vmatpush.msra.mxu0 0.0
    %149 = vmatpush.msra.mxu0 0.0
    %150 = vmatpush.msra.mxu0 0.0
    %151 = vmatpush.msra.mxu0 0.0
    %152 = vmatpush.msra.mxu0 0.0
    %153 = vmatpush.msra.mxu0 0.0
    %154 = vmatpush.msra.mxu0 0.0
    %155 = vmatpush.msra.mxu0 0.0
    %156 = vmatpush.msra.mxu0 0.0
    %157 = vmatpush.msra.mxu0 0.0
    %158 = vmatpush.msra.mxu0 0.0
    %159 = vmatpush.msra.mxu0 %v35
    %160 = vmatpush.msra.mxu0 %v34
    %161 = vmatpush.msra.mxu0 %v33
    %162 = vmatpush.msra.mxu0 %v32
    %163 = vmatmul.f32.gmra.mxu0 %v145
    %v164 = vpop.f32.mrf.mxu0
    %v165 = vadd.f32 0.0, %v164
    %166 = vdwg.mxu0
    %v168 = vrot.slane %v165, 6
    %v170 = vadd.f32 %v76, %v168
    %v172 = vsel %vm51, %v144, 0.0
    %v174 = vperm.slane %v45, 0
    %vm176 = vcmask 523264
    %v178 = vsel %vm176, %v172, 0
    %180 = vmatpush.msra.mxu0 0.0
    %181 = vmatpush.msra.mxu0 0.0
    %182 = vmatpush.msra.mxu0 0.0
    %183 = vmatpush.msra.mxu0 0.0
    %184 = vmatpush.msra.mxu0 0.0
    %185 = vmatpush.msra.mxu0 0.0
    %186 = vmatpush.msra.mxu0 0.0
    %187 = vmatpush.msra.mxu0 0.0
    %188 = vmatpush.msra.mxu0 %v44
    %189 = vmatpush.msra.mxu0 %v43
    %190 = vmatpush.msra.mxu0 %v42
    %191 = vmatpush.msra.mxu0 %v41
    %192 = vmatpush.msra.mxu0 %v40
    %193 = vmatpush.msra.mxu0 %v39
    %194 = vmatpush.msra.mxu0 %v38
    %195 = vmatpush.msra.mxu0 %v37
    %196 = vmatmul.f32.gmra.mxu0 %v178
    %v197 = vpop.f32.mrf.mxu0
    %v198 = vadd.f32 %v174, %v197
    %199 = vdwg.mxu0
    %v201 = vrot.slane %v170, 2
    %v204 = vrot.slane %v198, 6
    %vm206 = vcmask 1041408
    %v207 = vsel %vm206, %v201, %v204
    %v208 = vsel %vm206, %v135, 0.0
    %v209 = vxor.u32 %v207, 2147483648
    %v210 = vmul.f32 %v209, 1.442695
    %v211 = vpow.pop %v210
    %v212 = vadd.f32 %v211, 1.0
    %v213 = vrcp.pop %v212
    %v214 = vmul.f32 %v212, %v213
    %v215 = vsub.f32 1.0, %v214
    %v216 = vmul.f32 %v213, %v215
    %v217 = vadd.f32 %v213, %v216
    %vm218 = vweird.f32 %v212
    %vm219 = vweird.f32 %v213
    %vm220 = vmor %vm218, %vm219
    %v221 = vsel %vm220, %v213, %v217
    %v222 = vand.u32 2147483647, %v212
    %vm223 = vcmp.eq.f32.partialorder %v222, 8.507059e+37
    %v224 = vand.u32 %v212, 2147483648
    %v225 = vor.u32 1.1754944e-38, %v224
    %v226 = vsel %vm223, %v225, %v221
    %v227 = vmul.f32 1.0, %v226
    %v228 = vtanh.pop %v207
    %v229 = vmul.f32 %v227, %v208
    %231 = vrot.lane.b32.xlu0 %v228, 32
    %v232 = vpop.permute.xlu0 %231
    %v234 = vmul.f32 %v227, %v232
    %236 = vrot.lane.b32.xlu0 %v234, 32
    %v237 = vpop.permute.xlu0 %236
    %v239 = vadd.f32 %v229, %v237
    %v240 = vtanh.pop %v239
    %242 = vrot.lane.b32.xlu0 %v240, 32
    %v243 = vpop.permute.xlu0 %242
    %v245 = vmul.f32 %v227, %v243
    %247 = vrot.lane.b32.xlu0 %v245, 64
    %v248 = vpop.permute.xlu0 %247
    %v249 = vsel %vm51, %v248, 0
    %251 = vmatpush.msra.mxu0 0.0
    %252 = vmatpush.msra.mxu0 0.0
    %253 = vmatpush.msra.mxu0 0.0
    %254 = vmatpush.msra.mxu0 0.0
    %255 = vmatpush.msra.mxu0 0.0
    %256 = vmatpush.msra.mxu0 0.0
    %257 = vmatpush.msra.mxu0 0.0
    %258 = vmatpush.msra.mxu0 0.0
    %259 = vmatpush.msra.mxu0 0.0
    %260 = vmatpush.msra.mxu0 0.0
    %261 = vmatpush.msra.mxu0 0.0
    %262 = vmatpush.msra.mxu0 0.0
    %263 = vmatpush.msra.mxu0 %v35
    %264 = vmatpush.msra.mxu0 %v34
    %265 = vmatpush.msra.mxu0 %v33
    %266 = vmatpush.msra.mxu0 %v32
    %267 = vmatmul.f32.gmra.mxu0 %v249
    %v268 = vpop.f32.mrf.mxu0
    %v269 = vadd.f32 0.0, %v268
    %270 = vdwg.mxu0
    %v272 = vrot.slane %v269, 4
    %v274 = vadd.f32 %v76, %v272
    %v276 = vrot.slane %v245, 2
    %277 = vrot.lane.b32.xlu0 %v276, 96
    %v278 = vpop.permute.xlu0 %277
    %v280 = vsel %vm51, %v248, %v278
    %v282 = vsel %vm176, %v280, 0
    %284 = vmatpush.msra.mxu0 0.0
    %285 = vmatpush.msra.mxu0 0.0
    %286 = vmatpush.msra.mxu0 0.0
    %287 = vmatpush.msra.mxu0 0.0
    %288 = vmatpush.msra.mxu0 0.0
    %289 = vmatpush.msra.mxu0 0.0
    %290 = vmatpush.msra.mxu0 0.0
    %291 = vmatpush.msra.mxu0 0.0
    %292 = vmatpush.msra.mxu0 %v44
    %293 = vmatpush.msra.mxu0 %v43
    %294 = vmatpush.msra.mxu0 %v42
    %295 = vmatpush.msra.mxu0 %v41
    %296 = vmatpush.msra.mxu0 %v40
    %297 = vmatpush.msra.mxu0 %v39
    %298 = vmatpush.msra.mxu0 %v38
    %299 = vmatpush.msra.mxu0 %v37
    %300 = vmatmul.f32.gmra.mxu0 %v282
    %v301 = vpop.f32.mrf.mxu0
    %v302 = vadd.f32 %v174, %v301
    %303 = vdwg.mxu0
    %v305 = vrot.slane %v274, 4
    %v308 = vrot.slane %v302, 6
    %v310 = vsel %vm206, %v305, %v308
    %v311 = vxor.u32 %v310, 2147483648
    %v312 = vmul.f32 %v311, 1.442695
    %v313 = vpow.pop %v312
    %v314 = vadd.f32 %v313, 1.0
    %v315 = vrcp.pop %v314
    %v316 = vmul.f32 %v314, %v315
    %v317 = vsub.f32 1.0, %v316
    %v318 = vmul.f32 %v315, %v317
    %v319 = vadd.f32 %v315, %v318
    %vm320 = vweird.f32 %v314
    %vm321 = vweird.f32 %v315
    %vm322 = vmor %vm320, %vm321
    %v323 = vsel %vm322, %v315, %v319
    %v324 = vand.u32 2147483647, %v314
    %vm325 = vcmp.eq.f32.partialorder %v324, 8.507059e+37
    %v326 = vand.u32 %v314, 2147483648
    %v327 = vor.u32 1.1754944e-38, %v326
    %v328 = vsel %vm325, %v327, %v323
    %v329 = vmul.f32 1.0, %v328
    %v330 = vtanh.pop %v310
    %v331 = vmul.f32 %v329, %v239
    %333 = vrot.lane.b32.xlu0 %v330, 32
    %v334 = vpop.permute.xlu0 %333
    %v336 = vmul.f32 %v329, %v334
    %338 = vrot.lane.b32.xlu0 %v336, 32
    %v339 = vpop.permute.xlu0 %338
    %v341 = vadd.f32 %v331, %v339
    %v342 = vtanh.pop %v341
    %344 = vrot.lane.b32.xlu0 %v342, 32
    %v345 = vpop.permute.xlu0 %344
    %v347 = vmul.f32 %v329, %v345
    %349 = vrot.lane.b32.xlu0 %v347, 64
    %v350 = vpop.permute.xlu0 %349
    %v351 = vsel %vm51, %v350, 0
    %353 = vmatpush.msra.mxu0 0.0
    %354 = vmatpush.msra.mxu0 0.0
    %355 = vmatpush.msra.mxu0 0.0
    %356 = vmatpush.msra.mxu0 0.0
    %357 = vmatpush.msra.mxu0 0.0
    %358 = vmatpush.msra.mxu0 0.0
    %359 = vmatpush.msra.mxu0 0.0
    %360 = vmatpush.msra.mxu0 0.0
    %361 = vmatpush.msra.mxu0 0.0
    %362 = vmatpush.msra.mxu0 0.0
    %363 = vmatpush.msra.mxu0 0.0
    %364 = vmatpush.msra.mxu0 0.0
    %365 = vmatpush.msra.mxu0 %v35
    %366 = vmatpush.msra.mxu0 %v34
    %367 = vmatpush.msra.mxu0 %v33
    %368 = vmatpush.msra.mxu0 %v32
    %369 = vmatmul.f32.gmra.mxu0 %v351
    %v370 = vpop.f32.mrf.mxu0
    %v371 = vadd.f32 0.0, %v370
    %372 = vdwg.mxu0
    %v374 = vrot.slane %v371, 2
    %v376 = vadd.f32 %v76, %v374
    %v378 = vrot.slane %v347, 2
    %379 = vrot.lane.b32.xlu0 %v378, 96
    %v380 = vpop.permute.xlu0 %379
    %v382 = vsel %vm51, %v350, %v380
    %v384 = vsel %vm176, %v382, 0
    %386 = vmatpush.msra.mxu0 0.0
    %387 = vmatpush.msra.mxu0 0.0
    %388 = vmatpush.msra.mxu0 0.0
    %389 = vmatpush.msra.mxu0 0.0
    %390 = vmatpush.msra.mxu0 0.0
    %391 = vmatpush.msra.mxu0 0.0
    %392 = vmatpush.msra.mxu0 0.0
    %393 = vmatpush.msra.mxu0 0.0
    %394 = vmatpush.msra.mxu0 %v44
    %395 = vmatpush.msra.mxu0 %v43
    %396 = vmatpush.msra.mxu0 %v42
    %397 = vmatpush.msra.mxu0 %v41
    %398 = vmatpush.msra.mxu0 %v40
    %399 = vmatpush.msra.mxu0 %v39
    %400 = vmatpush.msra.mxu0 %v38
    %401 = vmatpush.msra.mxu0 %v37
    %402 = vmatmul.f32.gmra.mxu0 %v384
    %v403 = vpop.f32.mrf.mxu0
    %v404 = vadd.f32 %v174, %v403
    %405 = vdwg.mxu0
    %v407 = vrot.slane %v376, 6
    %v410 = vrot.slane %v404, 6
    %v412 = vsel %vm206, %v407, %v410
    %v413 = vxor.u32 %v412, 2147483648
    %v414 = vmul.f32 %v413, 1.442695
    %v415 = vpow.pop %v414
    %v416 = vadd.f32 %v415, 1.0
    %v417 = vrcp.pop %v416
    %v418 = vmul.f32 %v416, %v417
    %v419 = vsub.f32 1.0, %v418
    %v420 = vmul.f32 %v417, %v419
    %v421 = vadd.f32 %v417, %v420
    %vm422 = vweird.f32 %v416
    %vm423 = vweird.f32 %v417
    %vm424 = vmor %vm422, %vm423
    %v425 = vsel %vm424, %v417, %v421
    %v426 = vand.u32 2147483647, %v416
    %vm427 = vcmp.eq.f32.partialorder %v426, 8.507059e+37
    %v428 = vand.u32 %v416, 2147483648
    %v429 = vor.u32 1.1754944e-38, %v428
    %v430 = vsel %vm427, %v429, %v425
    %v431 = vmul.f32 1.0, %v430
    %v432 = vtanh.pop %v412
    %v433 = vmul.f32 %v431, %v341
    %435 = vrot.lane.b32.xlu0 %v432, 32
    %v436 = vpop.permute.xlu0 %435
    %v438 = vmul.f32 %v431, %v436
    %440 = vrot.lane.b32.xlu0 %v438, 32
    %v441 = vpop.permute.xlu0 %440
    %v443 = vadd.f32 %v433, %v441
    %v444 = vtanh.pop %v443
    %446 = vrot.lane.b32.xlu0 %v444, 32
    %v447 = vpop.permute.xlu0 %446
    %v449 = vmul.f32 %v431, %v447
    %451 = vrot.lane.b32.xlu0 %v449, 64
    %v452 = vpop.permute.xlu0 %451
    %v453 = vsel %vm51, %v452, 0
    %455 = vmatpush.msra.mxu0 0.0
    %456 = vmatpush.msra.mxu0 0.0
    %457 = vmatpush.msra.mxu0 0.0
    %458 = vmatpush.msra.mxu0 0.0
    %459 = vmatpush.msra.mxu0 0.0
    %460 = vmatpush.msra.mxu0 0.0
    %461 = vmatpush.msra.mxu0 0.0
    %462 = vmatpush.msra.mxu0 0.0
    %463 = vmatpush.msra.mxu0 0.0
    %464 = vmatpush.msra.mxu0 0.0
    %465 = vmatpush.msra.mxu0 0.0
    %466 = vmatpush.msra.mxu0 0.0
    %467 = vmatpush.msra.mxu0 %v35
    %468 = vmatpush.msra.mxu0 %v34
    %469 = vmatpush.msra.mxu0 %v33
    %470 = vmatpush.msra.mxu0 %v32
    %471 = vmatmul.f32.gmra.mxu0 %v453
    %v472 = vpop.f32.mrf.mxu0
    %v473 = vadd.f32 0.0, %v472
    %474 = vdwg.mxu0
    %v475 = vadd.f32 %v79, %v473
    %v477 = vrot.slane %v449, 2
    %478 = vrot.lane.b32.xlu0 %v477, 96
    %v479 = vpop.permute.xlu0 %478
    %v481 = vsel %vm51, %v452, %v479
    %v483 = vsel %vm176, %v481, 0
    %485 = vmatpush.msra.mxu0 0.0
    %486 = vmatpush.msra.mxu0 0.0
    %487 = vmatpush.msra.mxu0 0.0
    %488 = vmatpush.msra.mxu0 0.0
    %489 = vmatpush.msra.mxu0 0.0
    %490 = vmatpush.msra.mxu0 0.0
    %491 = vmatpush.msra.mxu0 0.0
    %492 = vmatpush.msra.mxu0 0.0
    %493 = vmatpush.msra.mxu0 %v44
    %494 = vmatpush.msra.mxu0 %v43
    %495 = vmatpush.msra.mxu0 %v42
    %496 = vmatpush.msra.mxu0 %v41
    %497 = vmatpush.msra.mxu0 %v40
    %498 = vmatpush.msra.mxu0 %v39
    %499 = vmatpush.msra.mxu0 %v38
    %500 = vmatpush.msra.mxu0 %v37
    %501 = vmatmul.f32.gmra.mxu0 %v483
    %v502 = vpop.f32.mrf.mxu0
    %v503 = vadd.f32 %v174, %v502
    %504 = vdwg.mxu0
    %v506 = vrot.slane %v503, 6
    %v508 = vsel %vm206, %v475, %v506
    %v509 = vxor.u32 %v508, 2147483648
    %v510 = vmul.f32 %v509, 1.442695
    %v511 = vpow.pop %v510
    %v512 = vadd.f32 %v511, 1.0
    %v513 = vrcp.pop %v512
    %v514 = vmul.f32 %v512, %v513
    %v515 = vsub.f32 1.0, %v514
    %v516 = vmul.f32 %v513, %v515
    %v517 = vadd.f32 %v513, %v516
    %vm518 = vweird.f32 %v512
    %vm519 = vweird.f32 %v513
    %vm520 = vmor %vm518, %vm519
    %v521 = vsel %vm520, %v513, %v517
    %v522 = vand.u32 2147483647, %v512
    %vm523 = vcmp.eq.f32.partialorder %v522, 8.507059e+37
    %v524 = vand.u32 %v512, 2147483648
    %v525 = vor.u32 1.1754944e-38, %v524
    %v526 = vsel %vm523, %v525, %v521
    %v527 = vmul.f32 1.0, %v526
    %v528 = vtanh.pop %v508
    %v529 = vmul.f32 %v527, %v443
    %531 = vrot.lane.b32.xlu0 %v528, 32
    %v532 = vpop.permute.xlu0 %531
    %v534 = vmul.f32 %v527, %v532
    %536 = vrot.lane.b32.xlu0 %v534, 32
    %v537 = vpop.permute.xlu0 %536
    %v539 = vadd.f32 %v529, %v537
    %v540 = vtanh.pop %v539
    %542 = vrot.lane.b32.xlu0 %v540, 32
    %v543 = vpop.permute.xlu0 %542
    %v545 = vmul.f32 %v527, %v543
    %547 = vrot.lane.b32.xlu0 %v545, 64
    %v548 = vpop.permute.xlu0 %547
    %v549 = vsel %vm51, %v548, 0
    %551 = vmatpush.msra.mxu0 0.0
    %552 = vmatpush.msra.mxu0 0.0
    %553 = vmatpush.msra.mxu0 0.0
    %554 = vmatpush.msra.mxu0 0.0
    %555 = vmatpush.msra.mxu0 0.0
    %556 = vmatpush.msra.mxu0 0.0
    %557 = vmatpush.msra.mxu0 0.0
    %558 = vmatpush.msra.mxu0 0.0
    %559 = vmatpush.msra.mxu0 0.0
    %560 = vmatpush.msra.mxu0 0.0
    %561 = vmatpush.msra.mxu0 0.0
    %562 = vmatpush.msra.mxu0 0.0
    %563 = vmatpush.msra.mxu0 %v35
    %564 = vmatpush.msra.mxu0 %v34
    %565 = vmatpush.msra.mxu0 %v33
    %566 = vmatpush.msra.mxu0 %v32
    %567 = vmatmul.f32.gmra.mxu0 %v549
    %v568 = vpop.f32.mrf.mxu0
    %v569 = vadd.f32 0.0, %v568
    %570 = vdwg.mxu0
    %v572 = vrot.slane %v569, 6
    %v574 = vadd.f32 %v79, %v572
    %v576 = vrot.slane %v545, 2
    %577 = vrot.lane.b32.xlu0 %v576, 96
    %v578 = vpop.permute.xlu0 %577
    %v580 = vsel %vm51, %v548, %v578
    %v582 = vsel %vm176, %v580, 0
    %584 = vmatpush.msra.mxu0 0.0
    %585 = vmatpush.msra.mxu0 0.0
    %586 = vmatpush.msra.mxu0 0.0
    %587 = vmatpush.msra.mxu0 0.0
    %588 = vmatpush.msra.mxu0 0.0
    %589 = vmatpush.msra.mxu0 0.0
    %590 = vmatpush.msra.mxu0 0.0
    %591 = vmatpush.msra.mxu0 0.0
    %592 = vmatpush.msra.mxu0 %v44
    %593 = vmatpush.msra.mxu0 %v43
    %594 = vmatpush.msra.mxu0 %v42
    %595 = vmatpush.msra.mxu0 %v41
    %596 = vmatpush.msra.mxu0 %v40
    %597 = vmatpush.msra.mxu0 %v39
    %598 = vmatpush.msra.mxu0 %v38
    %599 = vmatpush.msra.mxu0 %v37
    %600 = vmatmul.f32.gmra.mxu0 %v582
    %v601 = vpop.f32.mrf.mxu0
    %v602 = vadd.f32 %v174, %v601
    %603 = vdwg.mxu0
    %v605 = vrot.slane %v574, 2
    %v608 = vrot.slane %v602, 6
    %v610 = vsel %vm206, %v605, %v608
    %v611 = vxor.u32 %v610, 2147483648
    %v612 = vmul.f32 %v611, 1.442695
    %v613 = vpow.pop %v612
    %v614 = vadd.f32 %v613, 1.0
    %v615 = vrcp.pop %v614
    %v616 = vmul.f32 %v614, %v615
    %v617 = vsub.f32 1.0, %v616
    %v618 = vmul.f32 %v615, %v617
    %v619 = vadd.f32 %v615, %v618
    %vm620 = vweird.f32 %v614
    %vm621 = vweird.f32 %v615
    %vm622 = vmor %vm620, %vm621
    %v623 = vsel %vm622, %v615, %v619
    %v624 = vand.u32 2147483647, %v614
    %vm625 = vcmp.eq.f32.partialorder %v624, 8.507059e+37
    %v626 = vand.u32 %v614, 2147483648
    %v627 = vor.u32 1.1754944e-38, %v626
    %v628 = vsel %vm625, %v627, %v623
    %v629 = vmul.f32 1.0, %v628
    %v630 = vtanh.pop %v610
    %v631 = vmul.f32 %v629, %v539
    %633 = vrot.lane.b32.xlu0 %v630, 32
    %v634 = vpop.permute.xlu0 %633
    %v636 = vmul.f32 %v629, %v634
    %638 = vrot.lane.b32.xlu0 %v636, 32
    %v639 = vpop.permute.xlu0 %638
    %v641 = vadd.f32 %v631, %v639
    %v642 = vtanh.pop %v641
    %644 = vrot.lane.b32.xlu0 %v642, 32
    %v645 = vpop.permute.xlu0 %644
    %v647 = vmul.f32 %v629, %v645
    %649 = vrot.lane.b32.xlu0 %v647, 64
    %v650 = vpop.permute.xlu0 %649
    %v651 = vsel %vm51, %v650, 0
    %653 = vmatpush.msra.mxu0 0.0
    %654 = vmatpush.msra.mxu0 0.0
    %655 = vmatpush.msra.mxu0 0.0
    %656 = vmatpush.msra.mxu0 0.0
    %657 = vmatpush.msra.mxu0 0.0
    %658 = vmatpush.msra.mxu0 0.0
    %659 = vmatpush.msra.mxu0 0.0
    %660 = vmatpush.msra.mxu0 0.0
    %661 = vmatpush.msra.mxu0 0.0
    %662 = vmatpush.msra.mxu0 0.0
    %663 = vmatpush.msra.mxu0 0.0
    %664 = vmatpush.msra.mxu0 0.0
    %665 = vmatpush.msra.mxu0 %v35
    %666 = vmatpush.msra.mxu0 %v34
    %667 = vmatpush.msra.mxu0 %v33
    %668 = vmatpush.msra.mxu0 %v32
    %669 = vmatmul.f32.gmra.mxu0 %v651
    %v670 = vpop.f32.mrf.mxu0
    %v671 = vadd.f32 0.0, %v670
    %672 = vdwg.mxu0
    %v674 = vrot.slane %v671, 4
    %v676 = vadd.f32 %v79, %v674
    %v678 = vrot.slane %v647, 2
    %679 = vrot.lane.b32.xlu0 %v678, 96
    %v680 = vpop.permute.xlu0 %679
    %v682 = vsel %vm51, %v650, %v680
    %v684 = vsel %vm176, %v682, 0
    %686 = vmatpush.msra.mxu0 0.0
    %687 = vmatpush.msra.mxu0 0.0
    %688 = vmatpush.msra.mxu0 0.0
    %689 = vmatpush.msra.mxu0 0.0
    %690 = vmatpush.msra.mxu0 0.0
    %691 = vmatpush.msra.mxu0 0.0
    %692 = vmatpush.msra.mxu0 0.0
    %693 = vmatpush.msra.mxu0 0.0
    %694 = vmatpush.msra.mxu0 %v44
    %695 = vmatpush.msra.mxu0 %v43
    %696 = vmatpush.msra.mxu0 %v42
    %697 = vmatpush.msra.mxu0 %v41
    %698 = vmatpush.msra.mxu0 %v40
    %699 = vmatpush.msra.mxu0 %v39
    %700 = vmatpush.msra.mxu0 %v38
    %701 = vmatpush.msra.mxu0 %v37
    %702 = vmatmul.f32.gmra.mxu0 %v684
    %v703 = vpop.f32.mrf.mxu0
    %v704 = vadd.f32 %v174, %v703
    %705 = vdwg.mxu0
    %v707 = vrot.slane %v676, 4
    %v710 = vrot.slane %v704, 6
    %v712 = vsel %vm206, %v707, %v710
    %v713 = vxor.u32 %v712, 2147483648
    %v714 = vmul.f32 %v713, 1.442695
    %v715 = vpow.pop %v714
    %v716 = vadd.f32 %v715, 1.0
    %v717 = vrcp.pop %v716
    %v718 = vmul.f32 %v716, %v717
    %v719 = vsub.f32 1.0, %v718
    %v720 = vmul.f32 %v717, %v719
    %v721 = vadd.f32 %v717, %v720
    %vm722 = vweird.f32 %v716
    %vm723 = vweird.f32 %v717
    %vm724 = vmor %vm722, %vm723
    %v725 = vsel %vm724, %v717, %v721
    %v726 = vand.u32 2147483647, %v716
    %vm727 = vcmp.eq.f32.partialorder %v726, 8.507059e+37
    %v728 = vand.u32 %v716, 2147483648
    %v729 = vor.u32 1.1754944e-38, %v728
    %v730 = vsel %vm727, %v729, %v725
    %v731 = vmul.f32 1.0, %v730
    %v732 = vtanh.pop %v712
    %v733 = vmul.f32 %v731, %v641
    %735 = vrot.lane.b32.xlu0 %v732, 32
    %v736 = vpop.permute.xlu0 %735
    %v738 = vmul.f32 %v731, %v736
    %740 = vrot.lane.b32.xlu0 %v738, 32
    %v741 = vpop.permute.xlu0 %740
    %v743 = vadd.f32 %v733, %v741
    %v744 = vtanh.pop %v743
    %746 = vrot.lane.b32.xlu0 %v744, 32
    %v747 = vpop.permute.xlu0 %746
    %v749 = vmul.f32 %v731, %v747
    %751 = vrot.lane.b32.xlu0 %v749, 64
    %v752 = vpop.permute.xlu0 %751
    %v753 = vsel %vm51, %v752, 0
    %755 = vmatpush.msra.mxu0 0.0
    %756 = vmatpush.msra.mxu0 0.0
    %757 = vmatpush.msra.mxu0 0.0
    %758 = vmatpush.msra.mxu0 0.0
    %759 = vmatpush.msra.mxu0 0.0
    %760 = vmatpush.msra.mxu0 0.0
    %761 = vmatpush.msra.mxu0 0.0
    %762 = vmatpush.msra.mxu0 0.0
    %763 = vmatpush.msra.mxu0 0.0
    %764 = vmatpush.msra.mxu0 0.0
    %765 = vmatpush.msra.mxu0 0.0
    %766 = vmatpush.msra.mxu0 0.0
    %767 = vmatpush.msra.mxu0 %v35
    %768 = vmatpush.msra.mxu0 %v34
    %769 = vmatpush.msra.mxu0 %v33
    %770 = vmatpush.msra.mxu0 %v32
    %771 = vmatmul.f32.gmra.mxu0 %v753
    %v772 = vpop.f32.mrf.mxu0
    %v773 = vadd.f32 0.0, %v772
    %774 = vdwg.mxu0
    %v776 = vrot.slane %v773, 2
    %v778 = vadd.f32 %v79, %v776
    %v780 = vrot.slane %v749, 2
    %781 = vrot.lane.b32.xlu0 %v780, 96
    %v782 = vpop.permute.xlu0 %781
    %v784 = vsel %vm51, %v752, %v782
    %v786 = vsel %vm176, %v784, 0
    %788 = vmatpush.msra.mxu0 0.0
    %789 = vmatpush.msra.mxu0 0.0
    %790 = vmatpush.msra.mxu0 0.0
    %791 = vmatpush.msra.mxu0 0.0
    %792 = vmatpush.msra.mxu0 0.0
    %793 = vmatpush.msra.mxu0 0.0
    %794 = vmatpush.msra.mxu0 0.0
    %795 = vmatpush.msra.mxu0 0.0
    %796 = vmatpush.msra.mxu0 %v44
    %797 = vmatpush.msra.mxu0 %v43
    %798 = vmatpush.msra.mxu0 %v42
    %799 = vmatpush.msra.mxu0 %v41
    %800 = vmatpush.msra.mxu0 %v40
    %801 = vmatpush.msra.mxu0 %v39
    %802 = vmatpush.msra.mxu0 %v38
    %803 = vmatpush.msra.mxu0 %v37
    %804 = vmatmul.f32.gmra.mxu0 %v786
    %v805 = vpop.f32.mrf.mxu0
    %v806 = vadd.f32 %v174, %v805
    %807 = vdwg.mxu0
    %v809 = vrot.slane %v778, 6
    %v812 = vrot.slane %v806, 6
    %v814 = vsel %vm206, %v809, %v812
    %v815 = vxor.u32 %v814, 2147483648
    %v816 = vmul.f32 %v815, 1.442695
    %v817 = vpow.pop %v816
    %v818 = vadd.f32 %v817, 1.0
    %v819 = vrcp.pop %v818
    %v820 = vmul.f32 %v818, %v819
    %v821 = vsub.f32 1.0, %v820
    %v822 = vmul.f32 %v819, %v821
    %v823 = vadd.f32 %v819, %v822
    %vm824 = vweird.f32 %v818
    %vm825 = vweird.f32 %v819
    %vm826 = vmor %vm824, %vm825
    %v827 = vsel %vm826, %v819, %v823
    %v828 = vand.u32 2147483647, %v818
    %vm829 = vcmp.eq.f32.partialorder %v828, 8.507059e+37
    %v830 = vand.u32 %v818, 2147483648
    %v831 = vor.u32 1.1754944e-38, %v830
    %v832 = vsel %vm829, %v831, %v827
    %v833 = vmul.f32 1.0, %v832
    %v834 = vtanh.pop %v814
    %v835 = vmul.f32 %v833, %v743
    %837 = vrot.lane.b32.xlu0 %v834, 32
    %v838 = vpop.permute.xlu0 %837
    %v840 = vmul.f32 %v833, %v838
    %842 = vrot.lane.b32.xlu0 %v840, 32
    %v843 = vpop.permute.xlu0 %842
    %v845 = vadd.f32 %v835, %v843
    %v846 = vtanh.pop %v845
    %848 = vrot.lane.b32.xlu0 %v846, 32
    %v849 = vpop.permute.xlu0 %848
    %v851 = vmul.f32 %v833, %v849
    %853 = vrot.lane.b32.xlu0 %v851, 64
    %v854 = vpop.permute.xlu0 %853
    %v856 = vrot.slane %v851, 2
    %857 = vrot.lane.b32.xlu0 %v856, 96
    %v858 = vpop.permute.xlu0 %857
    %v860 = vsel %vm51, %v854, %v858
    %v862 = vsel %vm176, %v860, 0
    %864 = vmatpush.msra.mxu0 0.0
    %865 = vmatpush.msra.mxu0 0.0
    %866 = vmatpush.msra.mxu0 0.0
    %867 = vmatpush.msra.mxu0 0.0
    %868 = vmatpush.msra.mxu0 0.0
    %869 = vmatpush.msra.mxu0 0.0
    %870 = vmatpush.msra.mxu0 0.0
    %871 = vmatpush.msra.mxu0 0.0
    %872 = vmatpush.msra.mxu0 %v44
    %873 = vmatpush.msra.mxu0 %v43
    %874 = vmatpush.msra.mxu0 %v42
    %875 = vmatpush.msra.mxu0 %v41
    %876 = vmatpush.msra.mxu0 %v40
    %877 = vmatpush.msra.mxu0 %v39
    %878 = vmatpush.msra.mxu0 %v38
    %879 = vmatpush.msra.mxu0 %v37
    %880 = vmatmul.f32.gmra.mxu0 %v862
    %v881 = vpop.f32.mrf.mxu0
    %v882 = vadd.f32 %v174, %v881
    %883 = vdwg.mxu0
    %v884 = vxor.u32 %v882, 2147483648
    %v885 = vmul.f32 %v884, 1.442695
    %v886 = vpow.pop %v885
    %v887 = vadd.f32 %v886, 1.0
    %v888 = vrcp.pop %v887
    %v889 = vmul.f32 %v887, %v888
    %v890 = vsub.f32 1.0, %v889
    %v891 = vmul.f32 %v888, %v890
    %v892 = vadd.f32 %v888, %v891
    %vm893 = vweird.f32 %v887
    %vm894 = vweird.f32 %v888
    %vm895 = vmor %vm893, %vm894
    %v896 = vsel %vm895, %v888, %v892
    %v897 = vand.u32 2147483647, %v887
    %vm898 = vcmp.eq.f32.partialorder %v897, 8.507059e+37
    %v899 = vand.u32 %v887, 2147483648
    %v900 = vor.u32 1.1754944e-38, %v899
    %v901 = vsel %vm898, %v900, %v896
    %v902 = vmul.f32 1.0, %v901
    %v903 = vtanh.pop %v882
    %v905 = vrot.slane %v845, 2
    %v907 = vmul.f32 %v902, %v905
    %909 = vrot.lane.b32.xlu0 %v903, 32
    %v910 = vpop.permute.xlu0 %909
    %v912 = vmul.f32 %v902, %v910
    %914 = vrot.lane.b32.xlu0 %v912, 32
    %v915 = vpop.permute.xlu0 %914
    %v917 = vadd.f32 %v907, %v915
    %v918 = vtanh.pop %v917
    %920 = vrot.lane.b32.xlu0 %v918, 32
    %v921 = vpop.permute.xlu0 %920
    %v923 = vmul.f32 %v902, %v921
    %924 = vrot.lane.b32.xlu0 %v347, 96
    %v925 = vpop.permute.xlu0 %924
    %927 = vrot.lane.b32.xlu0 %v545, 32
    %v928 = vpop.permute.xlu0 %927
    %930 = vrot.lane.b32.xlu0 %v749, 96
    %v931 = vpop.permute.xlu0 %930
    %v934 = vrot.slane %v923, 6
    %935 = vrot.lane.b32.xlu0 %v934, 32
    %v936 = vpop.permute.xlu0 %935
    %v938 = vsel %vm51, %v248, %v925
    %v939 = vsel %vm176, %v938, %v449
    %vm940 = vcmask 785408
    %v941 = vsel %vm940, %v939, %v928
    %v942 = vsel %vm51, %v650, %v931
    %v943 = vsel %vm176, %v942, %v851
    %v944 = vsel %vm940, %v943, %v936
    %947 = vst.sshfl [vmem:[#allocation1] sm:$0xff pattern:$0x73625140] %v941
    %948 = vst.sshfl [vmem:[#allocation1 + $0x8] sm:$0xff pattern:$0x73625140] %v944
    %s949 = scalar_lea.vmem [#allocation1], 1
    %v950 = vld [vmem:[%s949] ss:$4 sm:$0xff]
    %952 = vst [vmem:[%s6] sm:$0xf] %v950
    %vm953 = vcmask 254976
    %954 = vst.msk [vmem:[#allocation2] sm:$0x3] %vm953, %v854
    %955 = vrot.lane.b32.xlu0 %v845, 96
    %v956 = vpop.permute.xlu0 %955
    %958 = vst.msk [vmem:[#allocation4] sm:$0x3] %vm953, %v956
    %959 = vrot.lane.b32.xlu0 %v923, 64
    %v960 = vpop.permute.xlu0 %959
    %s962 = scalar_lea.vmem [#allocation2], 2
    %963 = vst.msk [vmem:[%s962] sm:$0x3] %vm953, %v960
    %965 = vrot.lane.b32.xlu0 %v917, 96
    %v966 = vpop.permute.xlu0 %965
    %s968 = scalar_lea.vmem [#allocation4], 2
    %969 = vst.msk [vmem:[%s968] sm:$0x3] %vm953, %v966
    // Predicated region
    $region26: #{encoder_forward.1} parent=1 // pred_check
      _
    $region27: #{encoder_forward.1} parent=1 // pred_check_branch
      %971 = sbr.rel (0) target = $region29
    $region28: #{encoder_forward.1} parent=1 // pred_region
      _
    $region29: #{encoder_forward.1} parent=1 // pred_fallthru
      _
    // Predicated region
    $region30: #{encoder_forward.1} parent=1 // pred_check
      _
    $region31: #{encoder_forward.1} parent=1 // pred_check_branch
      %973 = sbr.rel (0) target = $region33
    $region32: #{encoder_forward.1} parent=1 // pred_region
      %975 = vsyncadd [#allocation3], 0
      %s976 = sshll.u32 [#allocation2], 4
      %s977 = int_to_ptr.vmem [resolvable:$true] %s976
      %s978 = sshll.u32 %s7, 4
      %s979 = int_to_ptr.hbm [resolvable:$true] %s978
      %984 = dma.vmem_to_hbm [thread:$0]  %s977, 64, %s979, [#allocation3], 32, 32, 2
    $region33: #{encoder_forward.1} parent=1 // pred_fallthru
      _
    // Predicated region
    $region34: #{encoder_forward.1} parent=1 // pred_check
      _
    $region35: #{encoder_forward.1} parent=1 // pred_check_branch
      %986 = sbr.rel (0) target = $region37
    $region36: #{encoder_forward.1} parent=1 // pred_region
      %988 = vsyncadd [#allocation5], 0
      %s989 = sshll.u32 [#allocation4], 4
      %s990 = int_to_ptr.vmem [resolvable:$true] %s989
      %s991 = sshll.u32 %s8, 4
      %s992 = int_to_ptr.hbm [resolvable:$true] %s991
      %997 = dma.vmem_to_hbm [thread:$0]  %s990, 64, %s992, [#allocation5], 32, 32, 2
    $region37: #{encoder_forward.1} parent=1 // pred_fallthru
      _
    // Predicated region
    $region38: #{encoder_forward.1} parent=1 // pred_check
      _
    $region39: #{encoder_forward.1} parent=1 // pred_check_branch
      %999 = sbr.rel (0) target = $region41
    $region40: #{encoder_forward.1} parent=1 // pred_region
      _
    $region41: #{encoder_forward.1} parent=1 // pred_fallthru
      _
    // Predicated region
    $region42: #{encoder_forward.1} parent=1 // pred_check
      _
    $region43: #{encoder_forward.1} parent=1 // pred_check_branch
      %1001 = sbr.rel (0) target = $region45
    $region44: #{encoder_forward.1} parent=1 // pred_region
      %1003 = dma.done [#allocation3], 64
    $region45: #{encoder_forward.1} parent=1 // pred_fallthru
      _
    // Predicated region
    $region46: #{encoder_forward.1} parent=1 // pred_check
      _
    $region47: #{encoder_forward.1} parent=1 // pred_check_branch
      %1005 = sbr.rel (0) target = $region49
    $region48: #{encoder_forward.1} parent=1 // pred_region
      %1007 = dma.done [#allocation5], 64
    $region49: #{encoder_forward.1} parent=1 // pred_fallthru
      _
    %1008 = vsyncpa [#allocation3], 1
    %1009 = vsyncpa [#allocation5], 1

</llo_original>
